<compile_context>
chip_gen: v7x
topology: tpu7x:2x2x1
jax: 0.10.0
libtpu: 0.0.40
codegen_flags: <defaults>
</compile_context>

<pallas_src>
import jax
import jax.numpy as jnp
from jax.experimental import pallas as pl
from jax.experimental.pallas import tpu as pltpu


def _start_tile_gather(hid_hbm, rows_vmem, sems, seq_lens_ref, slot, tile, bt):
    """Issue one row-DMA per batch entry of `tile` into rows_vmem[slot]."""
    batch = hid_hbm.shape[0]
    for i in range(bt):                                   # static unrolled
        b = tile * bt + i
        b_src = jnp.minimum(b, batch - 1)                 # padded rows re-read row B-1 (discarded)
        idx = seq_lens_ref[b]                             # already wrapped to [0, S-1]
        pltpu.make_async_copy(
            hid_hbm.at[b_src, pl.ds(idx, 1), :],          # [1, H] row in HBM
            rows_vmem.at[slot, pl.ds(i, 1), :],           # [1, H] slot in VMEM
            sems.at[slot, i]).start()


def _wait_tile_gather(hid_hbm, rows_vmem, sems, slot, bt):
    for i in range(bt):
        pltpu.make_async_copy(
            hid_hbm.at[0, pl.ds(0, 1), :],                # shape-only ref for the wait
            rows_vmem.at[slot, pl.ds(i, 1), :],
            sems.at[slot, i]).wait()


def _reward_head_kernel(seq_lens_ref,   # [bp] int32   (scalar prefetch, SMEM)
                        hid_hbm,        # [B, S, H]    (HBM, pl.ANY)
                        w_ref,          # [1, H]       (VMEM)
                        b_ref,          # [1] f32      (SMEM)
                        out_ref,        # [1, 1, bt]   (VMEM block, f32, lane-dense)
                        rows_vmem,      # [2, bt, H]   double-buffered gather scratch
                        sems):          # DMA sems, shape (2, bt)
    o = pl.program_id(0)                # outer axis: "parallel" (v7x megacore split)
    t = pl.program_id(1)                # inner axis: "arbitrary" (sequential, pipelined)
    n_inner = pl.num_programs(1)
    bt = rows_vmem.shape[1]

    tile = o * n_inner + t
    slot = t % 2
    next_slot = 1 - slot

    # --- scalar/VMEM reads hoisted above all DMA waits (wait breaks SMEM sst->sld fwd) ---
    bias = b_ref[0]
    w = w_ref[...]                                        # [1, H]

    # --- prime: first inner step of this core's chunk gathers its own tile ---
    @pl.when(t == 0)
    def _prime():
        _start_tile_gather(hid_hbm, rows_vmem, sems, seq_lens_ref, 0, tile, bt)

    # --- prefetch: start next tile's gather into the other slot before waiting ---
    @pl.when(t + 1 < n_inner)
    def _prefetch_next():
        _start_tile_gather(hid_hbm, rows_vmem, sems, seq_lens_ref,
                           next_slot, tile + 1, bt)

    # --- wait only on this tile's rows ---
    _wait_tile_gather(hid_hbm, rows_vmem, sems, slot, bt)

    # --- reward head: VPU multiply (input dtype; bf16 VALUs on v6e/v7x) + f32 lane reduce ---
    rows = rows_vmem[slot]                                # [bt, H]
    prod = rows * w.astype(rows.dtype)                    # [bt, H]
    r = jnp.sum(prod.astype(jnp.float32), axis=-1) + bias  # [bt] f32 accumulate
    out_ref[...] = r[None, None, :].astype(out_ref.dtype)  # lane-dense [1, 1, bt] store


def reward_head_pallas(last_hidden_state, attention_mask, w, b, *,
                       batch_tile=128, min_row_bytes_for_pallas=512):
    """Pallas version of the RewardModel head: gather last valid token per row, Linear(H,1)."""
    B, S, H = last_hidden_state.shape

    if attention_mask is None:
        seq_lens = jnp.full((B,), S - 1, dtype=jnp.int32)
    else:
        seq_lens = attention_mask.astype(jnp.int32).sum(axis=1) - 1
        # all-zero-mask rows: sum-1 == -1 -> PyTorch negative indexing picks the LAST token.
        seq_lens = jnp.where(seq_lens < 0, seq_lens + S, seq_lens).astype(jnp.int32)

    itemsize = jnp.dtype(last_hidden_state.dtype).itemsize
    if H * itemsize < min_row_bytes_for_pallas:
        # Sub-512B rows: per-DMA descriptor overhead dominates -> fused XLA gather wins.
        last_tok = jnp.take_along_axis(
            last_hidden_state, seq_lens[:, None, None], axis=1)[:, 0, :]
        return (last_tok.astype(jnp.float32) @ jnp.asarray(w, jnp.float32).T
                + jnp.asarray(b, jnp.float32))

    # Batch tile: multiple of 8 (fills vreg sublanes); don't over-pad tiny batches.
    bt = max(8, min(int(batch_tile), ((B + 7) // 8) * 8))
    bt = ((bt + 7) // 8) * 8
    num_tiles = (B + bt - 1) // bt
    bp = num_tiles * bt
    seq_lens = jnp.pad(seq_lens, (0, bp - B))             # padded rows gather row B-1, idx 0

    # v7x megacore: keep an even "parallel" axis when there are >= 2 tiles.
    n_outer = 2 if (num_tiles >= 2 and num_tiles % 2 == 0) else 1
    n_inner = num_tiles // n_outer

    out = pl.pallas_call(
        _reward_head_kernel,
        out_shape=jax.ShapeDtypeStruct((num_tiles, 1, bt), jnp.float32),
        grid_spec=pltpu.PrefetchScalarGridSpec(
            num_scalar_prefetch=1,
            grid=(n_outer, n_inner),
            in_specs=[
                pl.BlockSpec(memory_space=pl.ANY),                   # hidden stays in HBM
                pl.BlockSpec(memory_space=pltpu.MemorySpace.VMEM),   # head weight [1, H]
                pl.BlockSpec(memory_space=pltpu.MemorySpace.SMEM),   # head bias [1]
            ],
            out_specs=pl.BlockSpec((1, 1, bt),
                                   lambda o, t, seq_lens: (o * n_inner + t, 0, 0)),
            scratch_shapes=[
                pltpu.VMEM((2, bt, H), last_hidden_state.dtype),     # double-buffered rows
                pltpu.SemaphoreType.DMA((2, bt)),                    # per-row, per-slot sems
            ],
        ),
        compiler_params=pltpu.CompilerParams(
            dimension_semantics=("parallel", "arbitrary")),
        cost_estimate=pl.CostEstimate(
            flops=2 * B * H,
            bytes_accessed=int(B * H * itemsize + H * itemsize + B * 4 + B * 4 + 4),
            transcendentals=0),
    )(seq_lens, last_hidden_state, w, b)

    return out.reshape(bp)[:B].reshape(B, 1)


# ---------------------------------------------------------------------------
# Plain-JAX glue: deterministic stand-in for the pretrained causal LM.
# ---------------------------------------------------------------------------
def tiny_base_model(params, input_ids):
    emb = params["embed"][input_ids]                       # [B, S, H]
    h = jnp.tanh(emb @ params["w1"] + params["b1"])        # [B, S, H]
    return h


def reward_head_reference(last_hidden_state, attention_mask, w, b):
    B, S, H = last_hidden_state.shape
    if attention_mask is None:
        seq_len = jnp.full((B,), S - 1, dtype=jnp.int32)
    else:
        seq_len = attention_mask.astype(jnp.int32).sum(axis=1) - 1
        seq_len = jnp.where(seq_len < 0, seq_len + S, seq_len)   # PyTorch negative indexing
    last_tok = last_hidden_state[jnp.arange(B), seq_len].astype(jnp.float32)   # [B, H]
    return last_tok @ jnp.asarray(w, jnp.float32).T + jnp.asarray(b, jnp.float32)  # [B, 1]


if __name__ == "__main__":
    B, S, H, VOCAB = 32, 16, 256, 128

    key = jax.random.PRNGKey(0)
    k_ids, k_len, k_emb, k_w1, k_wval = jax.random.split(key, 5)

    input_ids = jax.random.randint(k_ids, (B, S), 0, VOCAB, dtype=jnp.int32)
    lengths = jax.random.randint(k_len, (B,), 1, S + 1, dtype=jnp.int32)
    lengths = lengths.at[0].set(0)    # all-zero-mask row -> last token (PyTorch semantics)
    lengths = lengths.at[1].set(S)    # full-length row
    attention_mask = (jnp.arange(S)[None, :] < lengths[:, None]).astype(jnp.int32)

    params = {
        "embed": 0.02 * jax.random.normal(k_emb, (VOCAB, H), dtype=jnp.float32),
        "w1": 0.05 * jax.random.normal(k_w1, (H, H), dtype=jnp.float32),
        "b1": jnp.zeros((H,), dtype=jnp.float32),
    }
    last_hidden_state = tiny_base_model(params, input_ids)   # [B, S, H]

    # 1) faithful zero-initialized head (per the module's __init__): reward is all zeros
    w_head = jnp.zeros((1, H), dtype=jnp.float32)
    b_head = jnp.zeros((1,), dtype=jnp.float32)
    r0 = jax.block_until_ready(
        reward_head_pallas(last_hidden_state, attention_mask, w_head, b_head, batch_tile=8))
    ref0 = reward_head_reference(last_hidden_state, attention_mask, w_head, b_head)
    assert r0.shape == (B, 1)
    assert jnp.allclose(r0, ref0, atol=1e-5), (r0, ref0)

    # 2) non-zero head, small tile (4 tiles, 2x2 grid) -> exercises double-buffered prefetch
    w_val = 0.5 * jax.random.normal(k_wval, (1, H), dtype=jnp.float32)
    b_val = jnp.array([0.25], dtype=jnp.float32)
    r1 = jax.block_until_ready(
        reward_head_pallas(last_hidden_state, attention_mask, w_val, b_val, batch_tile=8))
    ref1 = reward_head_reference(last_hidden_state, attention_mask, w_val, b_val)
    assert jnp.allclose(r1, ref1, atol=1e-4), (r1, ref1)

    # 3) default (large) batch tile -> single-tile path
    r2 = jax.block_until_ready(
        reward_head_pallas(last_hidden_state, attention_mask, w_val, b_val))
    assert jnp.allclose(r2, ref1, atol=1e-4), (r2, ref1)

    # 4) attention_mask=None branch (uses the last position)
    r3 = jax.block_until_ready(
        reward_head_pallas(last_hidden_state, None, w_val, b_val, batch_tile=8))
    ref3 = reward_head_reference(last_hidden_state, None, w_val, b_val)
    assert jnp.allclose(r3, ref3, atol=1e-4), (r3, ref3)

    print("KERNEL_OK")
</pallas_src>

<mosaic_0001>
module attributes {stable_mosaic.version = 11 : i64} {
  func.func @_reward_head_kernel(%arg0: i32, %arg1: i32, %arg2: memref<32xi32, #tpu.memory_space<smem>>, %arg3: memref<32x16x256xf32, #tpu.memory_space<any>>, %arg4: memref<1x256xf32, #tpu.memory_space<vmem>>, %arg5: memref<1xf32, #tpu.memory_space<smem>>, %arg6: memref<1x1x8xf32, #tpu.memory_space<vmem>>, %arg7: memref<2x8x256xf32, #tpu.memory_space<vmem>>, %arg8: memref<2x8x!tpu.dma_semaphore, #tpu.memory_space<semaphore_mem>>) attributes {dimension_semantics = [#tpu.dimension_semantics<parallel>, #tpu.dimension_semantics<arbitrary>], iteration_bounds = array<i64: 2, 2>, scalar_prefetch = 1 : i64, scratch_operands = 2 : i64, tpu.core_type = #tpu.core_type<tc>, window_params = [{}, {pipeline_mode = #tpu.pipeline_mode<synchronous>, transform_indices = @transform_1, window_bounds = array<i64: 1, 256>}, {transform_indices = @transform_2, window_bounds = array<i64: 1>}, {transform_indices = @transform_3, window_bounds = array<i64: 1, 1, 8>}]} {
    %c2_i32 = arith.constant 2 : i32
    %0 = arith.muli %arg0, %c2_i32 : i32
    %1 = arith.addi %0, %arg1 : i32
    %c2_i32_0 = arith.constant 2 : i32
    %c0_i32 = arith.constant 0 : i32
    %2 = arith.cmpi eq, %c2_i32_0, %c0_i32 : i32
    %c1_i32 = arith.constant 1 : i32
    %3 = arith.select %2, %c1_i32, %c2_i32_0 : i32
    %4 = arith.remsi %arg1, %3 : i32
    %c0_i32_1 = arith.constant 0 : i32
    %5 = arith.cmpi ne, %4, %c0_i32_1 : i32
    %c0_i32_2 = arith.constant 0 : i32
    %6 = arith.cmpi slt, %4, %c0_i32_2 : i32
    %c0_i32_3 = arith.constant 0 : i32
    %7 = arith.cmpi slt, %3, %c0_i32_3 : i32
    %8 = arith.xori %6, %7 : i1
    %9 = arith.andi %8, %5 : i1
    %10 = arith.addi %4, %3 : i32
    %11 = arith.select %9, %10, %4 : i32
    %c1_i32_4 = arith.constant 1 : i32
    %12 = arith.subi %c1_i32_4, %11 : i32
    %c0 = arith.constant 0 : index
    %13 = memref.load %arg5[%c0] : memref<1xf32, #tpu.memory_space<smem>>
    %c0_5 = arith.constant 0 : index
    %c0_6 = arith.constant 0 : index
    %14 = vector.load %arg4[%c0_5, %c0_6] : memref<1x256xf32, #tpu.memory_space<vmem>>, vector<1x256xf32>
    %c0_i32_7 = arith.constant 0 : i32
    %15 = arith.cmpi eq, %arg1, %c0_i32_7 : i32
    %16 = arith.extui %15 : i1 to i32
    %c0_i32_8 = arith.constant 0 : i32
    %17 = arith.cmpi ne, %16, %c0_i32_8 : i32
    scf.if %17 {
      %c8_i32 = arith.constant 8 : i32
      %80 = arith.muli %1, %c8_i32 : i32
      %c0_i32_60 = arith.constant 0 : i32
      %81 = arith.addi %80, %c0_i32_60 : i32
      %c31_i32 = arith.constant 31 : i32
      %82 = arith.minsi %81, %c31_i32 : i32
      %83 = arith.index_cast %81 : i32 to index
      %84 = memref.load %arg2[%83] : memref<32xi32, #tpu.memory_space<smem>>
      %c0_i32_61 = arith.constant 0 : i32
      %c0_i32_62 = arith.constant 0 : i32
      %c0_i32_63 = arith.constant 0 : i32
      %c0_i32_64 = arith.constant 0 : i32
      %85 = tpu.memref_slice %arg3[%82, %84, %c0_i32_64] : memref<32x16x256xf32, #tpu.memory_space<any>> -> memref<1x1x256xf32, #tpu.memory_space<any>>
      %86 = tpu.memref_squeeze %85 : memref<1x1x256xf32, #tpu.memory_space<any>> -> memref<1x256xf32, #tpu.memory_space<any>>
      %c0_i32_65 = arith.constant 0 : i32
      %c0_i32_66 = arith.constant 0 : i32
      %87 = tpu.memref_slice %arg7[%c0_i32_61, %c0_i32_65, %c0_i32_66] : memref<2x8x256xf32, #tpu.memory_space<vmem>> -> memref<1x1x256xf32, #tpu.memory_space<vmem>>
      %88 = tpu.memref_squeeze %87 : memref<1x1x256xf32, #tpu.memory_space<vmem>> -> memref<1x256xf32, #tpu.memory_space<vmem>>
      %89 = tpu.memref_slice %arg8[%c0_i32_62, %c0_i32_63] : memref<2x8x!tpu.dma_semaphore, #tpu.memory_space<semaphore_mem>> -> memref<1x1x!tpu.dma_semaphore, #tpu.memory_space<semaphore_mem>>
      %90 = tpu.memref_squeeze %89 : memref<1x1x!tpu.dma_semaphore, #tpu.memory_space<semaphore_mem>> -> memref<!tpu.dma_semaphore, #tpu.memory_space<semaphore_mem>>
      tpu.enqueue_dma source(%86 : memref<1x256xf32, #tpu.memory_space<any>>) target(%88 : memref<1x256xf32, #tpu.memory_space<vmem>>) target_semaphore(%90 : memref<!tpu.dma_semaphore, #tpu.memory_space<semaphore_mem>>)
      %c8_i32_67 = arith.constant 8 : i32
      %91 = arith.muli %1, %c8_i32_67 : i32
      %c1_i32_68 = arith.constant 1 : i32
      %92 = arith.addi %91, %c1_i32_68 : i32
      %c31_i32_69 = arith.constant 31 : i32
      %93 = arith.minsi %92, %c31_i32_69 : i32
      %94 = arith.index_cast %92 : i32 to index
      %95 = memref.load %arg2[%94] : memref<32xi32, #tpu.memory_space<smem>>
      %c0_i32_70 = arith.constant 0 : i32
      %c0_i32_71 = arith.constant 0 : i32
      %c1_i32_72 = arith.constant 1 : i32
      %c0_i32_73 = arith.constant 0 : i32
      %96 = tpu.memref_slice %arg3[%93, %95, %c0_i32_73] : memref<32x16x256xf32, #tpu.memory_space<any>> -> memref<1x1x256xf32, #tpu.memory_space<any>>
      %97 = tpu.memref_squeeze %96 : memref<1x1x256xf32, #tpu.memory_space<any>> -> memref<1x256xf32, #tpu.memory_space<any>>
      %c1_i32_74 = arith.constant 1 : i32
      %c0_i32_75 = arith.constant 0 : i32
      %98 = tpu.memref_slice %arg7[%c0_i32_70, %c1_i32_74, %c0_i32_75] : memref<2x8x256xf32, #tpu.memory_space<vmem>> -> memref<1x1x256xf32, #tpu.memory_space<vmem>>
      %99 = tpu.memref_squeeze %98 : memref<1x1x256xf32, #tpu.memory_space<vmem>> -> memref<1x256xf32, #tpu.memory_space<vmem>>
      %100 = tpu.memref_slice %arg8[%c0_i32_71, %c1_i32_72] : memref<2x8x!tpu.dma_semaphore, #tpu.memory_space<semaphore_mem>> -> memref<1x1x!tpu.dma_semaphore, #tpu.memory_space<semaphore_mem>>
      %101 = tpu.memref_squeeze %100 : memref<1x1x!tpu.dma_semaphore, #tpu.memory_space<semaphore_mem>> -> memref<!tpu.dma_semaphore, #tpu.memory_space<semaphore_mem>>
      tpu.enqueue_dma source(%97 : memref<1x256xf32, #tpu.memory_space<any>>) target(%99 : memref<1x256xf32, #tpu.memory_space<vmem>>) target_semaphore(%101 : memref<!tpu.dma_semaphore, #tpu.memory_space<semaphore_mem>>)
      %c8_i32_76 = arith.constant 8 : i32
      %102 = arith.muli %1, %c8_i32_76 : i32
      %c2_i32_77 = arith.constant 2 : i32
      %103 = arith.addi %102, %c2_i32_77 : i32
      %c31_i32_78 = arith.constant 31 : i32
      %104 = arith.minsi %103, %c31_i32_78 : i32
      %105 = arith.index_cast %103 : i32 to index
      %106 = memref.load %arg2[%105] : memref<32xi32, #tpu.memory_space<smem>>
      %c0_i32_79 = arith.constant 0 : i32
      %c0_i32_80 = arith.constant 0 : i32
      %c2_i32_81 = arith.constant 2 : i32
      %c0_i32_82 = arith.constant 0 : i32
      %107 = tpu.memref_slice %arg3[%104, %106, %c0_i32_82] : memref<32x16x256xf32, #tpu.memory_space<any>> -> memref<1x1x256xf32, #tpu.memory_space<any>>
      %108 = tpu.memref_squeeze %107 : memref<1x1x256xf32, #tpu.memory_space<any>> -> memref<1x256xf32, #tpu.memory_space<any>>
      %c2_i32_83 = arith.constant 2 : i32
      %c0_i32_84 = arith.constant 0 : i32
      %109 = tpu.memref_slice %arg7[%c0_i32_79, %c2_i32_83, %c0_i32_84] : memref<2x8x256xf32, #tpu.memory_space<vmem>> -> memref<1x1x256xf32, #tpu.memory_space<vmem>>
      %110 = tpu.memref_squeeze %109 : memref<1x1x256xf32, #tpu.memory_space<vmem>> -> memref<1x256xf32, #tpu.memory_space<vmem>>
      %111 = tpu.memref_slice %arg8[%c0_i32_80, %c2_i32_81] : memref<2x8x!tpu.dma_semaphore, #tpu.memory_space<semaphore_mem>> -> memref<1x1x!tpu.dma_semaphore, #tpu.memory_space<semaphore_mem>>
      %112 = tpu.memref_squeeze %111 : memref<1x1x!tpu.dma_semaphore, #tpu.memory_space<semaphore_mem>> -> memref<!tpu.dma_semaphore, #tpu.memory_space<semaphore_mem>>
      tpu.enqueue_dma source(%108 : memref<1x256xf32, #tpu.memory_space<any>>) target(%110 : memref<1x256xf32, #tpu.memory_space<vmem>>) target_semaphore(%112 : memref<!tpu.dma_semaphore, #tpu.memory_space<semaphore_mem>>)
      %c8_i32_85 = arith.constant 8 : i32
      %113 = arith.muli %1, %c8_i32_85 : i32
      %c3_i32_86 = arith.constant 3 : i32
      %114 = arith.addi %113, %c3_i32_86 : i32
      %c31_i32_87 = arith.constant 31 : i32
      %115 = arith.minsi %114, %c31_i32_87 : i32
      %116 = arith.index_cast %114 : i32 to index
      %117 = memref.load %arg2[%116] : memref<32xi32, #tpu.memory_space<smem>>
      %c0_i32_88 = arith.constant 0 : i32
      %c0_i32_89 = arith.constant 0 : i32
      %c3_i32_90 = arith.constant 3 : i32
      %c0_i32_91 = arith.constant 0 : i32
      %118 = tpu.memref_slice %arg3[%115, %117, %c0_i32_91] : memref<32x16x256xf32, #tpu.memory_space<any>> -> memref<1x1x256xf32, #tpu.memory_space<any>>
      %119 = tpu.memref_squeeze %118 : memref<1x1x256xf32, #tpu.memory_space<any>> -> memref<1x256xf32, #tpu.memory_space<any>>
      %c3_i32_92 = arith.constant 3 : i32
      %c0_i32_93 = arith.constant 0 : i32
      %120 = tpu.memref_slice %arg7[%c0_i32_88, %c3_i32_92, %c0_i32_93] : memref<2x8x256xf32, #tpu.memory_space<vmem>> -> memref<1x1x256xf32, #tpu.memory_space<vmem>>
      %121 = tpu.memref_squeeze %120 : memref<1x1x256xf32, #tpu.memory_space<vmem>> -> memref<1x256xf32, #tpu.memory_space<vmem>>
      %122 = tpu.memref_slice %arg8[%c0_i32_89, %c3_i32_90] : memref<2x8x!tpu.dma_semaphore, #tpu.memory_space<semaphore_mem>> -> memref<1x1x!tpu.dma_semaphore, #tpu.memory_space<semaphore_mem>>
      %123 = tpu.memref_squeeze %122 : memref<1x1x!tpu.dma_semaphore, #tpu.memory_space<semaphore_mem>> -> memref<!tpu.dma_semaphore, #tpu.memory_space<semaphore_mem>>
      tpu.enqueue_dma source(%119 : memref<1x256xf32, #tpu.memory_space<any>>) target(%121 : memref<1x256xf32, #tpu.memory_space<vmem>>) target_semaphore(%123 : memref<!tpu.dma_semaphore, #tpu.memory_space<semaphore_mem>>)
      %c8_i32_94 = arith.constant 8 : i32
      %124 = arith.muli %1, %c8_i32_94 : i32
      %c4_i32_95 = arith.constant 4 : i32
      %125 = arith.addi %124, %c4_i32_95 : i32
      %c31_i32_96 = arith.constant 31 : i32
      %126 = arith.minsi %125, %c31_i32_96 : i32
      %127 = arith.index_cast %125 : i32 to index
      %128 = memref.load %arg2[%127] : memref<32xi32, #tpu.memory_space<smem>>
      %c0_i32_97 = arith.constant 0 : i32
      %c0_i32_98 = arith.constant 0 : i32
      %c4_i32_99 = arith.constant 4 : i32
      %c0_i32_100 = arith.constant 0 : i32
      %129 = tpu.memref_slice %arg3[%126, %128, %c0_i32_100] : memref<32x16x256xf32, #tpu.memory_space<any>> -> memref<1x1x256xf32, #tpu.memory_space<any>>
      %130 = tpu.memref_squeeze %129 : memref<1x1x256xf32, #tpu.memory_space<any>> -> memref<1x256xf32, #tpu.memory_space<any>>
      %c4_i32_101 = arith.constant 4 : i32
      %c0_i32_102 = arith.constant 0 : i32
      %131 = tpu.memref_slice %arg7[%c0_i32_97, %c4_i32_101, %c0_i32_102] : memref<2x8x256xf32, #tpu.memory_space<vmem>> -> memref<1x1x256xf32, #tpu.memory_space<vmem>>
      %132 = tpu.memref_squeeze %131 : memref<1x1x256xf32, #tpu.memory_space<vmem>> -> memref<1x256xf32, #tpu.memory_space<vmem>>
      %133 = tpu.memref_slice %arg8[%c0_i32_98, %c4_i32_99] : memref<2x8x!tpu.dma_semaphore, #tpu.memory_space<semaphore_mem>> -> memref<1x1x!tpu.dma_semaphore, #tpu.memory_space<semaphore_mem>>
      %134 = tpu.memref_squeeze %133 : memref<1x1x!tpu.dma_semaphore, #tpu.memory_space<semaphore_mem>> -> memref<!tpu.dma_semaphore, #tpu.memory_space<semaphore_mem>>
      tpu.enqueue_dma source(%130 : memref<1x256xf32, #tpu.memory_space<any>>) target(%132 : memref<1x256xf32, #tpu.memory_space<vmem>>) target_semaphore(%134 : memref<!tpu.dma_semaphore, #tpu.memory_space<semaphore_mem>>)
      %c8_i32_103 = arith.constant 8 : i32
      %135 = arith.muli %1, %c8_i32_103 : i32
      %c5_i32_104 = arith.constant 5 : i32
      %136 = arith.addi %135, %c5_i32_104 : i32
      %c31_i32_105 = arith.constant 31 : i32
      %137 = arith.minsi %136, %c31_i32_105 : i32
      %138 = arith.index_cast %136 : i32 to index
      %139 = memref.load %arg2[%138] : memref<32xi32, #tpu.memory_space<smem>>
      %c0_i32_106 = arith.constant 0 : i32
      %c0_i32_107 = arith.constant 0 : i32
      %c5_i32_108 = arith.constant 5 : i32
      %c0_i32_109 = arith.constant 0 : i32
      %140 = tpu.memref_slice %arg3[%137, %139, %c0_i32_109] : memref<32x16x256xf32, #tpu.memory_space<any>> -> memref<1x1x256xf32, #tpu.memory_space<any>>
      %141 = tpu.memref_squeeze %140 : memref<1x1x256xf32, #tpu.memory_space<any>> -> memref<1x256xf32, #tpu.memory_space<any>>
      %c5_i32_110 = arith.constant 5 : i32
      %c0_i32_111 = arith.constant 0 : i32
      %142 = tpu.memref_slice %arg7[%c0_i32_106, %c5_i32_110, %c0_i32_111] : memref<2x8x256xf32, #tpu.memory_space<vmem>> -> memref<1x1x256xf32, #tpu.memory_space<vmem>>
      %143 = tpu.memref_squeeze %142 : memref<1x1x256xf32, #tpu.memory_space<vmem>> -> memref<1x256xf32, #tpu.memory_space<vmem>>
      %144 = tpu.memref_slice %arg8[%c0_i32_107, %c5_i32_108] : memref<2x8x!tpu.dma_semaphore, #tpu.memory_space<semaphore_mem>> -> memref<1x1x!tpu.dma_semaphore, #tpu.memory_space<semaphore_mem>>
      %145 = tpu.memref_squeeze %144 : memref<1x1x!tpu.dma_semaphore, #tpu.memory_space<semaphore_mem>> -> memref<!tpu.dma_semaphore, #tpu.memory_space<semaphore_mem>>
      tpu.enqueue_dma source(%141 : memref<1x256xf32, #tpu.memory_space<any>>) target(%143 : memref<1x256xf32, #tpu.memory_space<vmem>>) target_semaphore(%145 : memref<!tpu.dma_semaphore, #tpu.memory_space<semaphore_mem>>)
      %c8_i32_112 = arith.constant 8 : i32
      %146 = arith.muli %1, %c8_i32_112 : i32
      %c6_i32_113 = arith.constant 6 : i32
      %147 = arith.addi %146, %c6_i32_113 : i32
      %c31_i32_114 = arith.constant 31 : i32
      %148 = arith.minsi %147, %c31_i32_114 : i32
      %149 = arith.index_cast %147 : i32 to index
      %150 = memref.load %arg2[%149] : memref<32xi32, #tpu.memory_space<smem>>
      %c0_i32_115 = arith.constant 0 : i32
      %c0_i32_116 = arith.constant 0 : i32
      %c6_i32_117 = arith.constant 6 : i32
      %c0_i32_118 = arith.constant 0 : i32
      %151 = tpu.memref_slice %arg3[%148, %150, %c0_i32_118] : memref<32x16x256xf32, #tpu.memory_space<any>> -> memref<1x1x256xf32, #tpu.memory_space<any>>
      %152 = tpu.memref_squeeze %151 : memref<1x1x256xf32, #tpu.memory_space<any>> -> memref<1x256xf32, #tpu.memory_space<any>>
      %c6_i32_119 = arith.constant 6 : i32
      %c0_i32_120 = arith.constant 0 : i32
      %153 = tpu.memref_slice %arg7[%c0_i32_115, %c6_i32_119, %c0_i32_120] : memref<2x8x256xf32, #tpu.memory_space<vmem>> -> memref<1x1x256xf32, #tpu.memory_space<vmem>>
      %154 = tpu.memref_squeeze %153 : memref<1x1x256xf32, #tpu.memory_space<vmem>> -> memref<1x256xf32, #tpu.memory_space<vmem>>
      %155 = tpu.memref_slice %arg8[%c0_i32_116, %c6_i32_117] : memref<2x8x!tpu.dma_semaphore, #tpu.memory_space<semaphore_mem>> -> memref<1x1x!tpu.dma_semaphore, #tpu.memory_space<semaphore_mem>>
      %156 = tpu.memref_squeeze %155 : memref<1x1x!tpu.dma_semaphore, #tpu.memory_space<semaphore_mem>> -> memref<!tpu.dma_semaphore, #tpu.memory_space<semaphore_mem>>
      tpu.enqueue_dma source(%152 : memref<1x256xf32, #tpu.memory_space<any>>) target(%154 : memref<1x256xf32, #tpu.memory_space<vmem>>) target_semaphore(%156 : memref<!tpu.dma_semaphore, #tpu.memory_space<semaphore_mem>>)
      %c8_i32_121 = arith.constant 8 : i32
      %157 = arith.muli %1, %c8_i32_121 : i32
      %c7_i32_122 = arith.constant 7 : i32
      %158 = arith.addi %157, %c7_i32_122 : i32
      %c31_i32_123 = arith.constant 31 : i32
      %159 = arith.minsi %158, %c31_i32_123 : i32
      %160 = arith.index_cast %158 : i32 to index
      %161 = memref.load %arg2[%160] : memref<32xi32, #tpu.memory_space<smem>>
      %c0_i32_124 = arith.constant 0 : i32
      %c0_i32_125 = arith.constant 0 : i32
      %c7_i32_126 = arith.constant 7 : i32
      %c0_i32_127 = arith.constant 0 : i32
      %162 = tpu.memref_slice %arg3[%159, %161, %c0_i32_127] : memref<32x16x256xf32, #tpu.memory_space<any>> -> memref<1x1x256xf32, #tpu.memory_space<any>>
      %163 = tpu.memref_squeeze %162 : memref<1x1x256xf32, #tpu.memory_space<any>> -> memref<1x256xf32, #tpu.memory_space<any>>
      %c7_i32_128 = arith.constant 7 : i32
      %c0_i32_129 = arith.constant 0 : i32
      %164 = tpu.memref_slice %arg7[%c0_i32_124, %c7_i32_128, %c0_i32_129] : memref<2x8x256xf32, #tpu.memory_space<vmem>> -> memref<1x1x256xf32, #tpu.memory_space<vmem>>
      %165 = tpu.memref_squeeze %164 : memref<1x1x256xf32, #tpu.memory_space<vmem>> -> memref<1x256xf32, #tpu.memory_space<vmem>>
      %166 = tpu.memref_slice %arg8[%c0_i32_125, %c7_i32_126] : memref<2x8x!tpu.dma_semaphore, #tpu.memory_space<semaphore_mem>> -> memref<1x1x!tpu.dma_semaphore, #tpu.memory_space<semaphore_mem>>
      %167 = tpu.memref_squeeze %166 : memref<1x1x!tpu.dma_semaphore, #tpu.memory_space<semaphore_mem>> -> memref<!tpu.dma_semaphore, #tpu.memory_space<semaphore_mem>>
      tpu.enqueue_dma source(%163 : memref<1x256xf32, #tpu.memory_space<any>>) target(%165 : memref<1x256xf32, #tpu.memory_space<vmem>>) target_semaphore(%167 : memref<!tpu.dma_semaphore, #tpu.memory_space<semaphore_mem>>)
    } else {
    }
    %c1_i32_9 = arith.constant 1 : i32
    %18 = arith.addi %arg1, %c1_i32_9 : i32
    %c2_i32_10 = arith.constant 2 : i32
    %19 = arith.cmpi slt, %18, %c2_i32_10 : i32
    %20 = arith.extui %19 : i1 to i32
    %c0_i32_11 = arith.constant 0 : i32
    %21 = arith.cmpi ne, %20, %c0_i32_11 : i32
    scf.if %21 {
      %c1_i32_60 = arith.constant 1 : i32
      %80 = arith.addi %1, %c1_i32_60 : i32
      %c8_i32 = arith.constant 8 : i32
      %81 = arith.muli %80, %c8_i32 : i32
      %c0_i32_61 = arith.constant 0 : i32
      %82 = arith.addi %81, %c0_i32_61 : i32
      %c31_i32 = arith.constant 31 : i32
      %83 = arith.minsi %82, %c31_i32 : i32
      %84 = arith.index_cast %82 : i32 to index
      %85 = memref.load %arg2[%84] : memref<32xi32, #tpu.memory_space<smem>>
      %c0_i32_62 = arith.constant 0 : i32
      %c0_i32_63 = arith.constant 0 : i32
      %86 = tpu.memref_slice %arg3[%83, %85, %c0_i32_63] : memref<32x16x256xf32, #tpu.memory_space<any>> -> memref<1x1x256xf32, #tpu.memory_space<any>>
      %87 = tpu.memref_squeeze %86 : memref<1x1x256xf32, #tpu.memory_space<any>> -> memref<1x256xf32, #tpu.memory_space<any>>
      %c0_i32_64 = arith.constant 0 : i32
      %c0_i32_65 = arith.constant 0 : i32
      %88 = tpu.memref_slice %arg7[%12, %c0_i32_64, %c0_i32_65] : memref<2x8x256xf32, #tpu.memory_space<vmem>> -> memref<1x1x256xf32, #tpu.memory_space<vmem>>
      %89 = tpu.memref_squeeze %88 : memref<1x1x256xf32, #tpu.memory_space<vmem>> -> memref<1x256xf32, #tpu.memory_space<vmem>>
      %90 = tpu.memref_slice %arg8[%12, %c0_i32_62] : memref<2x8x!tpu.dma_semaphore, #tpu.memory_space<semaphore_mem>> -> memref<1x1x!tpu.dma_semaphore, #tpu.memory_space<semaphore_mem>>
      %91 = tpu.memref_squeeze %90 : memref<1x1x!tpu.dma_semaphore, #tpu.memory_space<semaphore_mem>> -> memref<!tpu.dma_semaphore, #tpu.memory_space<semaphore_mem>>
      tpu.enqueue_dma source(%87 : memref<1x256xf32, #tpu.memory_space<any>>) target(%89 : memref<1x256xf32, #tpu.memory_space<vmem>>) target_semaphore(%91 : memref<!tpu.dma_semaphore, #tpu.memory_space<semaphore_mem>>)
      %c8_i32_66 = arith.constant 8 : i32
      %92 = arith.muli %80, %c8_i32_66 : i32
      %c1_i32_67 = arith.constant 1 : i32
      %93 = arith.addi %92, %c1_i32_67 : i32
      %c31_i32_68 = arith.constant 31 : i32
      %94 = arith.minsi %93, %c31_i32_68 : i32
      %95 = arith.index_cast %93 : i32 to index
      %96 = memref.load %arg2[%95] : memref<32xi32, #tpu.memory_space<smem>>
      %c1_i32_69 = arith.constant 1 : i32
      %c0_i32_70 = arith.constant 0 : i32
      %97 = tpu.memref_slice %arg3[%94, %96, %c0_i32_70] : memref<32x16x256xf32, #tpu.memory_space<any>> -> memref<1x1x256xf32, #tpu.memory_space<any>>
      %98 = tpu.memref_squeeze %97 : memref<1x1x256xf32, #tpu.memory_space<any>> -> memref<1x256xf32, #tpu.memory_space<any>>
      %c1_i32_71 = arith.constant 1 : i32
      %c0_i32_72 = arith.constant 0 : i32
      %99 = tpu.memref_slice %arg7[%12, %c1_i32_71, %c0_i32_72] : memref<2x8x256xf32, #tpu.memory_space<vmem>> -> memref<1x1x256xf32, #tpu.memory_space<vmem>>
      %100 = tpu.memref_squeeze %99 : memref<1x1x256xf32, #tpu.memory_space<vmem>> -> memref<1x256xf32, #tpu.memory_space<vmem>>
      %101 = tpu.memref_slice %arg8[%12, %c1_i32_69] : memref<2x8x!tpu.dma_semaphore, #tpu.memory_space<semaphore_mem>> -> memref<1x1x!tpu.dma_semaphore, #tpu.memory_space<semaphore_mem>>
      %102 = tpu.memref_squeeze %101 : memref<1x1x!tpu.dma_semaphore, #tpu.memory_space<semaphore_mem>> -> memref<!tpu.dma_semaphore, #tpu.memory_space<semaphore_mem>>
      tpu.enqueue_dma source(%98 : memref<1x256xf32, #tpu.memory_space<any>>) target(%100 : memref<1x256xf32, #tpu.memory_space<vmem>>) target_semaphore(%102 : memref<!tpu.dma_semaphore, #tpu.memory_space<semaphore_mem>>)
      %c8_i32_73 = arith.constant 8 : i32
      %103 = arith.muli %80, %c8_i32_73 : i32
      %c2_i32_74 = arith.constant 2 : i32
      %104 = arith.addi %103, %c2_i32_74 : i32
      %c31_i32_75 = arith.constant 31 : i32
      %105 = arith.minsi %104, %c31_i32_75 : i32
      %106 = arith.index_cast %104 : i32 to index
      %107 = memref.load %arg2[%106] : memref<32xi32, #tpu.memory_space<smem>>
      %c2_i32_76 = arith.constant 2 : i32
      %c0_i32_77 = arith.constant 0 : i32
      %108 = tpu.memref_slice %arg3[%105, %107, %c0_i32_77] : memref<32x16x256xf32, #tpu.memory_space<any>> -> memref<1x1x256xf32, #tpu.memory_space<any>>
      %109 = tpu.memref_squeeze %108 : memref<1x1x256xf32, #tpu.memory_space<any>> -> memref<1x256xf32, #tpu.memory_space<any>>
      %c2_i32_78 = arith.constant 2 : i32
      %c0_i32_79 = arith.constant 0 : i32
      %110 = tpu.memref_slice %arg7[%12, %c2_i32_78, %c0_i32_79] : memref<2x8x256xf32, #tpu.memory_space<vmem>> -> memref<1x1x256xf32, #tpu.memory_space<vmem>>
      %111 = tpu.memref_squeeze %110 : memref<1x1x256xf32, #tpu.memory_space<vmem>> -> memref<1x256xf32, #tpu.memory_space<vmem>>
      %112 = tpu.memref_slice %arg8[%12, %c2_i32_76] : memref<2x8x!tpu.dma_semaphore, #tpu.memory_space<semaphore_mem>> -> memref<1x1x!tpu.dma_semaphore, #tpu.memory_space<semaphore_mem>>
      %113 = tpu.memref_squeeze %112 : memref<1x1x!tpu.dma_semaphore, #tpu.memory_space<semaphore_mem>> -> memref<!tpu.dma_semaphore, #tpu.memory_space<semaphore_mem>>
      tpu.enqueue_dma source(%109 : memref<1x256xf32, #tpu.memory_space<any>>) target(%111 : memref<1x256xf32, #tpu.memory_space<vmem>>) target_semaphore(%113 : memref<!tpu.dma_semaphore, #tpu.memory_space<semaphore_mem>>)
      %c8_i32_80 = arith.constant 8 : i32
      %114 = arith.muli %80, %c8_i32_80 : i32
      %c3_i32_81 = arith.constant 3 : i32
      %115 = arith.addi %114, %c3_i32_81 : i32
      %c31_i32_82 = arith.constant 31 : i32
      %116 = arith.minsi %115, %c31_i32_82 : i32
      %117 = arith.index_cast %115 : i32 to index
      %118 = memref.load %arg2[%117] : memref<32xi32, #tpu.memory_space<smem>>
      %c3_i32_83 = arith.constant 3 : i32
      %c0_i32_84 = arith.constant 0 : i32
      %119 = tpu.memref_slice %arg3[%116, %118, %c0_i32_84] : memref<32x16x256xf32, #tpu.memory_space<any>> -> memref<1x1x256xf32, #tpu.memory_space<any>>
      %120 = tpu.memref_squeeze %119 : memref<1x1x256xf32, #tpu.memory_space<any>> -> memref<1x256xf32, #tpu.memory_space<any>>
      %c3_i32_85 = arith.constant 3 : i32
      %c0_i32_86 = arith.constant 0 : i32
      %121 = tpu.memref_slice %arg7[%12, %c3_i32_85, %c0_i32_86] : memref<2x8x256xf32, #tpu.memory_space<vmem>> -> memref<1x1x256xf32, #tpu.memory_space<vmem>>
      %122 = tpu.memref_squeeze %121 : memref<1x1x256xf32, #tpu.memory_space<vmem>> -> memref<1x256xf32, #tpu.memory_space<vmem>>
      %123 = tpu.memref_slice %arg8[%12, %c3_i32_83] : memref<2x8x!tpu.dma_semaphore, #tpu.memory_space<semaphore_mem>> -> memref<1x1x!tpu.dma_semaphore, #tpu.memory_space<semaphore_mem>>
      %124 = tpu.memref_squeeze %123 : memref<1x1x!tpu.dma_semaphore, #tpu.memory_space<semaphore_mem>> -> memref<!tpu.dma_semaphore, #tpu.memory_space<semaphore_mem>>
      tpu.enqueue_dma source(%120 : memref<1x256xf32, #tpu.memory_space<any>>) target(%122 : memref<1x256xf32, #tpu.memory_space<vmem>>) target_semaphore(%124 : memref<!tpu.dma_semaphore, #tpu.memory_space<semaphore_mem>>)
      %c8_i32_87 = arith.constant 8 : i32
      %125 = arith.muli %80, %c8_i32_87 : i32
      %c4_i32_88 = arith.constant 4 : i32
      %126 = arith.addi %125, %c4_i32_88 : i32
      %c31_i32_89 = arith.constant 31 : i32
      %127 = arith.minsi %126, %c31_i32_89 : i32
      %128 = arith.index_cast %126 : i32 to index
      %129 = memref.load %arg2[%128] : memref<32xi32, #tpu.memory_space<smem>>
      %c4_i32_90 = arith.constant 4 : i32
      %c0_i32_91 = arith.constant 0 : i32
      %130 = tpu.memref_slice %arg3[%127, %129, %c0_i32_91] : memref<32x16x256xf32, #tpu.memory_space<any>> -> memref<1x1x256xf32, #tpu.memory_space<any>>
      %131 = tpu.memref_squeeze %130 : memref<1x1x256xf32, #tpu.memory_space<any>> -> memref<1x256xf32, #tpu.memory_space<any>>
      %c4_i32_92 = arith.constant 4 : i32
      %c0_i32_93 = arith.constant 0 : i32
      %132 = tpu.memref_slice %arg7[%12, %c4_i32_92, %c0_i32_93] : memref<2x8x256xf32, #tpu.memory_space<vmem>> -> memref<1x1x256xf32, #tpu.memory_space<vmem>>
      %133 = tpu.memref_squeeze %132 : memref<1x1x256xf32, #tpu.memory_space<vmem>> -> memref<1x256xf32, #tpu.memory_space<vmem>>
      %134 = tpu.memref_slice %arg8[%12, %c4_i32_90] : memref<2x8x!tpu.dma_semaphore, #tpu.memory_space<semaphore_mem>> -> memref<1x1x!tpu.dma_semaphore, #tpu.memory_space<semaphore_mem>>
      %135 = tpu.memref_squeeze %134 : memref<1x1x!tpu.dma_semaphore, #tpu.memory_space<semaphore_mem>> -> memref<!tpu.dma_semaphore, #tpu.memory_space<semaphore_mem>>
      tpu.enqueue_dma source(%131 : memref<1x256xf32, #tpu.memory_space<any>>) target(%133 : memref<1x256xf32, #tpu.memory_space<vmem>>) target_semaphore(%135 : memref<!tpu.dma_semaphore, #tpu.memory_space<semaphore_mem>>)
      %c8_i32_94 = arith.constant 8 : i32
      %136 = arith.muli %80, %c8_i32_94 : i32
      %c5_i32_95 = arith.constant 5 : i32
      %137 = arith.addi %136, %c5_i32_95 : i32
      %c31_i32_96 = arith.constant 31 : i32
      %138 = arith.minsi %137, %c31_i32_96 : i32
      %139 = arith.index_cast %137 : i32 to index
      %140 = memref.load %arg2[%139] : memref<32xi32, #tpu.memory_space<smem>>
      %c5_i32_97 = arith.constant 5 : i32
      %c0_i32_98 = arith.constant 0 : i32
      %141 = tpu.memref_slice %arg3[%138, %140, %c0_i32_98] : memref<32x16x256xf32, #tpu.memory_space<any>> -> memref<1x1x256xf32, #tpu.memory_space<any>>
      %142 = tpu.memref_squeeze %141 : memref<1x1x256xf32, #tpu.memory_space<any>> -> memref<1x256xf32, #tpu.memory_space<any>>
      %c5_i32_99 = arith.constant 5 : i32
      %c0_i32_100 = arith.constant 0 : i32
      %143 = tpu.memref_slice %arg7[%12, %c5_i32_99, %c0_i32_100] : memref<2x8x256xf32, #tpu.memory_space<vmem>> -> memref<1x1x256xf32, #tpu.memory_space<vmem>>
      %144 = tpu.memref_squeeze %143 : memref<1x1x256xf32, #tpu.memory_space<vmem>> -> memref<1x256xf32, #tpu.memory_space<vmem>>
      %145 = tpu.memref_slice %arg8[%12, %c5_i32_97] : memref<2x8x!tpu.dma_semaphore, #tpu.memory_space<semaphore_mem>> -> memref<1x1x!tpu.dma_semaphore, #tpu.memory_space<semaphore_mem>>
      %146 = tpu.memref_squeeze %145 : memref<1x1x!tpu.dma_semaphore, #tpu.memory_space<semaphore_mem>> -> memref<!tpu.dma_semaphore, #tpu.memory_space<semaphore_mem>>
      tpu.enqueue_dma source(%142 : memref<1x256xf32, #tpu.memory_space<any>>) target(%144 : memref<1x256xf32, #tpu.memory_space<vmem>>) target_semaphore(%146 : memref<!tpu.dma_semaphore, #tpu.memory_space<semaphore_mem>>)
      %c8_i32_101 = arith.constant 8 : i32
      %147 = arith.muli %80, %c8_i32_101 : i32
      %c6_i32_102 = arith.constant 6 : i32
      %148 = arith.addi %147, %c6_i32_102 : i32
      %c31_i32_103 = arith.constant 31 : i32
      %149 = arith.minsi %148, %c31_i32_103 : i32
      %150 = arith.index_cast %148 : i32 to index
      %151 = memref.load %arg2[%150] : memref<32xi32, #tpu.memory_space<smem>>
      %c6_i32_104 = arith.constant 6 : i32
      %c0_i32_105 = arith.constant 0 : i32
      %152 = tpu.memref_slice %arg3[%149, %151, %c0_i32_105] : memref<32x16x256xf32, #tpu.memory_space<any>> -> memref<1x1x256xf32, #tpu.memory_space<any>>
      %153 = tpu.memref_squeeze %152 : memref<1x1x256xf32, #tpu.memory_space<any>> -> memref<1x256xf32, #tpu.memory_space<any>>
      %c6_i32_106 = arith.constant 6 : i32
      %c0_i32_107 = arith.constant 0 : i32
      %154 = tpu.memref_slice %arg7[%12, %c6_i32_106, %c0_i32_107] : memref<2x8x256xf32, #tpu.memory_space<vmem>> -> memref<1x1x256xf32, #tpu.memory_space<vmem>>
      %155 = tpu.memref_squeeze %154 : memref<1x1x256xf32, #tpu.memory_space<vmem>> -> memref<1x256xf32, #tpu.memory_space<vmem>>
      %156 = tpu.memref_slice %arg8[%12, %c6_i32_104] : memref<2x8x!tpu.dma_semaphore, #tpu.memory_space<semaphore_mem>> -> memref<1x1x!tpu.dma_semaphore, #tpu.memory_space<semaphore_mem>>
      %157 = tpu.memref_squeeze %156 : memref<1x1x!tpu.dma_semaphore, #tpu.memory_space<semaphore_mem>> -> memref<!tpu.dma_semaphore, #tpu.memory_space<semaphore_mem>>
      tpu.enqueue_dma source(%153 : memref<1x256xf32, #tpu.memory_space<any>>) target(%155 : memref<1x256xf32, #tpu.memory_space<vmem>>) target_semaphore(%157 : memref<!tpu.dma_semaphore, #tpu.memory_space<semaphore_mem>>)
      %c8_i32_108 = arith.constant 8 : i32
      %158 = arith.muli %80, %c8_i32_108 : i32
      %c7_i32_109 = arith.constant 7 : i32
      %159 = arith.addi %158, %c7_i32_109 : i32
      %c31_i32_110 = arith.constant 31 : i32
      %160 = arith.minsi %159, %c31_i32_110 : i32
      %161 = arith.index_cast %159 : i32 to index
      %162 = memref.load %arg2[%161] : memref<32xi32, #tpu.memory_space<smem>>
      %c7_i32_111 = arith.constant 7 : i32
      %c0_i32_112 = arith.constant 0 : i32
      %163 = tpu.memref_slice %arg3[%160, %162, %c0_i32_112] : memref<32x16x256xf32, #tpu.memory_space<any>> -> memref<1x1x256xf32, #tpu.memory_space<any>>
      %164 = tpu.memref_squeeze %163 : memref<1x1x256xf32, #tpu.memory_space<any>> -> memref<1x256xf32, #tpu.memory_space<any>>
      %c7_i32_113 = arith.constant 7 : i32
      %c0_i32_114 = arith.constant 0 : i32
      %165 = tpu.memref_slice %arg7[%12, %c7_i32_113, %c0_i32_114] : memref<2x8x256xf32, #tpu.memory_space<vmem>> -> memref<1x1x256xf32, #tpu.memory_space<vmem>>
      %166 = tpu.memref_squeeze %165 : memref<1x1x256xf32, #tpu.memory_space<vmem>> -> memref<1x256xf32, #tpu.memory_space<vmem>>
      %167 = tpu.memref_slice %arg8[%12, %c7_i32_111] : memref<2x8x!tpu.dma_semaphore, #tpu.memory_space<semaphore_mem>> -> memref<1x1x!tpu.dma_semaphore, #tpu.memory_space<semaphore_mem>>
      %168 = tpu.memref_squeeze %167 : memref<1x1x!tpu.dma_semaphore, #tpu.memory_space<semaphore_mem>> -> memref<!tpu.dma_semaphore, #tpu.memory_space<semaphore_mem>>
      tpu.enqueue_dma source(%164 : memref<1x256xf32, #tpu.memory_space<any>>) target(%166 : memref<1x256xf32, #tpu.memory_space<vmem>>) target_semaphore(%168 : memref<!tpu.dma_semaphore, #tpu.memory_space<semaphore_mem>>)
    } else {
    }
    %c0_i32_12 = arith.constant 0 : i32
    %c0_i32_13 = arith.constant 0 : i32
    %c0_i32_14 = arith.constant 0 : i32
    %c0_i32_15 = arith.constant 0 : i32
    %22 = tpu.memref_slice %arg3[%c0_i32_12, %c0_i32_14, %c0_i32_15] : memref<32x16x256xf32, #tpu.memory_space<any>> -> memref<1x1x256xf32, #tpu.memory_space<any>>
    %23 = tpu.memref_squeeze %22 : memref<1x1x256xf32, #tpu.memory_space<any>> -> memref<1x256xf32, #tpu.memory_space<any>>
    %c0_i32_16 = arith.constant 0 : i32
    %c0_i32_17 = arith.constant 0 : i32
    %24 = tpu.memref_slice %arg7[%11, %c0_i32_16, %c0_i32_17] : memref<2x8x256xf32, #tpu.memory_space<vmem>> -> memref<1x1x256xf32, #tpu.memory_space<vmem>>
    %25 = tpu.memref_squeeze %24 : memref<1x1x256xf32, #tpu.memory_space<vmem>> -> memref<1x256xf32, #tpu.memory_space<vmem>>
    %26 = tpu.memref_slice %arg8[%11, %c0_i32_13] : memref<2x8x!tpu.dma_semaphore, #tpu.memory_space<semaphore_mem>> -> memref<1x1x!tpu.dma_semaphore, #tpu.memory_space<semaphore_mem>>
    %27 = tpu.memref_squeeze %26 : memref<1x1x!tpu.dma_semaphore, #tpu.memory_space<semaphore_mem>> -> memref<!tpu.dma_semaphore, #tpu.memory_space<semaphore_mem>>
    tpu.wait_dma2 semaphore(%27 : memref<!tpu.dma_semaphore, #tpu.memory_space<semaphore_mem>>) src(%23 : memref<1x256xf32, #tpu.memory_space<any>>) dst(%25 : memref<1x256xf32, #tpu.memory_space<vmem>>)
    %c0_i32_18 = arith.constant 0 : i32
    %c1_i32_19 = arith.constant 1 : i32
    %c0_i32_20 = arith.constant 0 : i32
    %c0_i32_21 = arith.constant 0 : i32
    %28 = tpu.memref_slice %arg3[%c0_i32_18, %c0_i32_20, %c0_i32_21] : memref<32x16x256xf32, #tpu.memory_space<any>> -> memref<1x1x256xf32, #tpu.memory_space<any>>
    %29 = tpu.memref_squeeze %28 : memref<1x1x256xf32, #tpu.memory_space<any>> -> memref<1x256xf32, #tpu.memory_space<any>>
    %c1_i32_22 = arith.constant 1 : i32
    %c0_i32_23 = arith.constant 0 : i32
    %30 = tpu.memref_slice %arg7[%11, %c1_i32_22, %c0_i32_23] : memref<2x8x256xf32, #tpu.memory_space<vmem>> -> memref<1x1x256xf32, #tpu.memory_space<vmem>>
    %31 = tpu.memref_squeeze %30 : memref<1x1x256xf32, #tpu.memory_space<vmem>> -> memref<1x256xf32, #tpu.memory_space<vmem>>
    %32 = tpu.memref_slice %arg8[%11, %c1_i32_19] : memref<2x8x!tpu.dma_semaphore, #tpu.memory_space<semaphore_mem>> -> memref<1x1x!tpu.dma_semaphore, #tpu.memory_space<semaphore_mem>>
    %33 = tpu.memref_squeeze %32 : memref<1x1x!tpu.dma_semaphore, #tpu.memory_space<semaphore_mem>> -> memref<!tpu.dma_semaphore, #tpu.memory_space<semaphore_mem>>
    tpu.wait_dma2 semaphore(%33 : memref<!tpu.dma_semaphore, #tpu.memory_space<semaphore_mem>>) src(%29 : memref<1x256xf32, #tpu.memory_space<any>>) dst(%31 : memref<1x256xf32, #tpu.memory_space<vmem>>)
    %c0_i32_24 = arith.constant 0 : i32
    %c2_i32_25 = arith.constant 2 : i32
    %c0_i32_26 = arith.constant 0 : i32
    %c0_i32_27 = arith.constant 0 : i32
    %34 = tpu.memref_slice %arg3[%c0_i32_24, %c0_i32_26, %c0_i32_27] : memref<32x16x256xf32, #tpu.memory_space<any>> -> memref<1x1x256xf32, #tpu.memory_space<any>>
    %35 = tpu.memref_squeeze %34 : memref<1x1x256xf32, #tpu.memory_space<any>> -> memref<1x256xf32, #tpu.memory_space<any>>
    %c2_i32_28 = arith.constant 2 : i32
    %c0_i32_29 = arith.constant 0 : i32
    %36 = tpu.memref_slice %arg7[%11, %c2_i32_28, %c0_i32_29] : memref<2x8x256xf32, #tpu.memory_space<vmem>> -> memref<1x1x256xf32, #tpu.memory_space<vmem>>
    %37 = tpu.memref_squeeze %36 : memref<1x1x256xf32, #tpu.memory_space<vmem>> -> memref<1x256xf32, #tpu.memory_space<vmem>>
    %38 = tpu.memref_slice %arg8[%11, %c2_i32_25] : memref<2x8x!tpu.dma_semaphore, #tpu.memory_space<semaphore_mem>> -> memref<1x1x!tpu.dma_semaphore, #tpu.memory_space<semaphore_mem>>
    %39 = tpu.memref_squeeze %38 : memref<1x1x!tpu.dma_semaphore, #tpu.memory_space<semaphore_mem>> -> memref<!tpu.dma_semaphore, #tpu.memory_space<semaphore_mem>>
    tpu.wait_dma2 semaphore(%39 : memref<!tpu.dma_semaphore, #tpu.memory_space<semaphore_mem>>) src(%35 : memref<1x256xf32, #tpu.memory_space<any>>) dst(%37 : memref<1x256xf32, #tpu.memory_space<vmem>>)
    %c0_i32_30 = arith.constant 0 : i32
    %c3_i32 = arith.constant 3 : i32
    %c0_i32_31 = arith.constant 0 : i32
    %c0_i32_32 = arith.constant 0 : i32
    %40 = tpu.memref_slice %arg3[%c0_i32_30, %c0_i32_31, %c0_i32_32] : memref<32x16x256xf32, #tpu.memory_space<any>> -> memref<1x1x256xf32, #tpu.memory_space<any>>
    %41 = tpu.memref_squeeze %40 : memref<1x1x256xf32, #tpu.memory_space<any>> -> memref<1x256xf32, #tpu.memory_space<any>>
    %c3_i32_33 = arith.constant 3 : i32
    %c0_i32_34 = arith.constant 0 : i32
    %42 = tpu.memref_slice %arg7[%11, %c3_i32_33, %c0_i32_34] : memref<2x8x256xf32, #tpu.memory_space<vmem>> -> memref<1x1x256xf32, #tpu.memory_space<vmem>>
    %43 = tpu.memref_squeeze %42 : memref<1x1x256xf32, #tpu.memory_space<vmem>> -> memref<1x256xf32, #tpu.memory_space<vmem>>
    %44 = tpu.memref_slice %arg8[%11, %c3_i32] : memref<2x8x!tpu.dma_semaphore, #tpu.memory_space<semaphore_mem>> -> memref<1x1x!tpu.dma_semaphore, #tpu.memory_space<semaphore_mem>>
    %45 = tpu.memref_squeeze %44 : memref<1x1x!tpu.dma_semaphore, #tpu.memory_space<semaphore_mem>> -> memref<!tpu.dma_semaphore, #tpu.memory_space<semaphore_mem>>
    tpu.wait_dma2 semaphore(%45 : memref<!tpu.dma_semaphore, #tpu.memory_space<semaphore_mem>>) src(%41 : memref<1x256xf32, #tpu.memory_space<any>>) dst(%43 : memref<1x256xf32, #tpu.memory_space<vmem>>)
    %c0_i32_35 = arith.constant 0 : i32
    %c4_i32 = arith.constant 4 : i32
    %c0_i32_36 = arith.constant 0 : i32
    %c0_i32_37 = arith.constant 0 : i32
    %46 = tpu.memref_slice %arg3[%c0_i32_35, %c0_i32_36, %c0_i32_37] : memref<32x16x256xf32, #tpu.memory_space<any>> -> memref<1x1x256xf32, #tpu.memory_space<any>>
    %47 = tpu.memref_squeeze %46 : memref<1x1x256xf32, #tpu.memory_space<any>> -> memref<1x256xf32, #tpu.memory_space<any>>
    %c4_i32_38 = arith.constant 4 : i32
    %c0_i32_39 = arith.constant 0 : i32
    %48 = tpu.memref_slice %arg7[%11, %c4_i32_38, %c0_i32_39] : memref<2x8x256xf32, #tpu.memory_space<vmem>> -> memref<1x1x256xf32, #tpu.memory_space<vmem>>
    %49 = tpu.memref_squeeze %48 : memref<1x1x256xf32, #tpu.memory_space<vmem>> -> memref<1x256xf32, #tpu.memory_space<vmem>>
    %50 = tpu.memref_slice %arg8[%11, %c4_i32] : memref<2x8x!tpu.dma_semaphore, #tpu.memory_space<semaphore_mem>> -> memref<1x1x!tpu.dma_semaphore, #tpu.memory_space<semaphore_mem>>
    %51 = tpu.memref_squeeze %50 : memref<1x1x!tpu.dma_semaphore, #tpu.memory_space<semaphore_mem>> -> memref<!tpu.dma_semaphore, #tpu.memory_space<semaphore_mem>>
    tpu.wait_dma2 semaphore(%51 : memref<!tpu.dma_semaphore, #tpu.memory_space<semaphore_mem>>) src(%47 : memref<1x256xf32, #tpu.memory_space<any>>) dst(%49 : memref<1x256xf32, #tpu.memory_space<vmem>>)
    %c0_i32_40 = arith.constant 0 : i32
    %c5_i32 = arith.constant 5 : i32
    %c0_i32_41 = arith.constant 0 : i32
    %c0_i32_42 = arith.constant 0 : i32
    %52 = tpu.memref_slice %arg3[%c0_i32_40, %c0_i32_41, %c0_i32_42] : memref<32x16x256xf32, #tpu.memory_space<any>> -> memref<1x1x256xf32, #tpu.memory_space<any>>
    %53 = tpu.memref_squeeze %52 : memref<1x1x256xf32, #tpu.memory_space<any>> -> memref<1x256xf32, #tpu.memory_space<any>>
    %c5_i32_43 = arith.constant 5 : i32
    %c0_i32_44 = arith.constant 0 : i32
    %54 = tpu.memref_slice %arg7[%11, %c5_i32_43, %c0_i32_44] : memref<2x8x256xf32, #tpu.memory_space<vmem>> -> memref<1x1x256xf32, #tpu.memory_space<vmem>>
    %55 = tpu.memref_squeeze %54 : memref<1x1x256xf32, #tpu.memory_space<vmem>> -> memref<1x256xf32, #tpu.memory_space<vmem>>
    %56 = tpu.memref_slice %arg8[%11, %c5_i32] : memref<2x8x!tpu.dma_semaphore, #tpu.memory_space<semaphore_mem>> -> memref<1x1x!tpu.dma_semaphore, #tpu.memory_space<semaphore_mem>>
    %57 = tpu.memref_squeeze %56 : memref<1x1x!tpu.dma_semaphore, #tpu.memory_space<semaphore_mem>> -> memref<!tpu.dma_semaphore, #tpu.memory_space<semaphore_mem>>
    tpu.wait_dma2 semaphore(%57 : memref<!tpu.dma_semaphore, #tpu.memory_space<semaphore_mem>>) src(%53 : memref<1x256xf32, #tpu.memory_space<any>>) dst(%55 : memref<1x256xf32, #tpu.memory_space<vmem>>)
    %c0_i32_45 = arith.constant 0 : i32
    %c6_i32 = arith.constant 6 : i32
    %c0_i32_46 = arith.constant 0 : i32
    %c0_i32_47 = arith.constant 0 : i32
    %58 = tpu.memref_slice %arg3[%c0_i32_45, %c0_i32_46, %c0_i32_47] : memref<32x16x256xf32, #tpu.memory_space<any>> -> memref<1x1x256xf32, #tpu.memory_space<any>>
    %59 = tpu.memref_squeeze %58 : memref<1x1x256xf32, #tpu.memory_space<any>> -> memref<1x256xf32, #tpu.memory_space<any>>
    %c6_i32_48 = arith.constant 6 : i32
    %c0_i32_49 = arith.constant 0 : i32
    %60 = tpu.memref_slice %arg7[%11, %c6_i32_48, %c0_i32_49] : memref<2x8x256xf32, #tpu.memory_space<vmem>> -> memref<1x1x256xf32, #tpu.memory_space<vmem>>
    %61 = tpu.memref_squeeze %60 : memref<1x1x256xf32, #tpu.memory_space<vmem>> -> memref<1x256xf32, #tpu.memory_space<vmem>>
    %62 = tpu.memref_slice %arg8[%11, %c6_i32] : memref<2x8x!tpu.dma_semaphore, #tpu.memory_space<semaphore_mem>> -> memref<1x1x!tpu.dma_semaphore, #tpu.memory_space<semaphore_mem>>
    %63 = tpu.memref_squeeze %62 : memref<1x1x!tpu.dma_semaphore, #tpu.memory_space<semaphore_mem>> -> memref<!tpu.dma_semaphore, #tpu.memory_space<semaphore_mem>>
    tpu.wait_dma2 semaphore(%63 : memref<!tpu.dma_semaphore, #tpu.memory_space<semaphore_mem>>) src(%59 : memref<1x256xf32, #tpu.memory_space<any>>) dst(%61 : memref<1x256xf32, #tpu.memory_space<vmem>>)
    %c0_i32_50 = arith.constant 0 : i32
    %c7_i32 = arith.constant 7 : i32
    %c0_i32_51 = arith.constant 0 : i32
    %c0_i32_52 = arith.constant 0 : i32
    %64 = tpu.memref_slice %arg3[%c0_i32_50, %c0_i32_51, %c0_i32_52] : memref<32x16x256xf32, #tpu.memory_space<any>> -> memref<1x1x256xf32, #tpu.memory_space<any>>
    %65 = tpu.memref_squeeze %64 : memref<1x1x256xf32, #tpu.memory_space<any>> -> memref<1x256xf32, #tpu.memory_space<any>>
    %c7_i32_53 = arith.constant 7 : i32
    %c0_i32_54 = arith.constant 0 : i32
    %66 = tpu.memref_slice %arg7[%11, %c7_i32_53, %c0_i32_54] : memref<2x8x256xf32, #tpu.memory_space<vmem>> -> memref<1x1x256xf32, #tpu.memory_space<vmem>>
    %67 = tpu.memref_squeeze %66 : memref<1x1x256xf32, #tpu.memory_space<vmem>> -> memref<1x256xf32, #tpu.memory_space<vmem>>
    %68 = tpu.memref_slice %arg8[%11, %c7_i32] : memref<2x8x!tpu.dma_semaphore, #tpu.memory_space<semaphore_mem>> -> memref<1x1x!tpu.dma_semaphore, #tpu.memory_space<semaphore_mem>>
    %69 = tpu.memref_squeeze %68 : memref<1x1x!tpu.dma_semaphore, #tpu.memory_space<semaphore_mem>> -> memref<!tpu.dma_semaphore, #tpu.memory_space<semaphore_mem>>
    tpu.wait_dma2 semaphore(%69 : memref<!tpu.dma_semaphore, #tpu.memory_space<semaphore_mem>>) src(%65 : memref<1x256xf32, #tpu.memory_space<any>>) dst(%67 : memref<1x256xf32, #tpu.memory_space<vmem>>)
    %70 = arith.index_cast %11 : i32 to index
    %c0_55 = arith.constant 0 : index
    %c0_56 = arith.constant 0 : index
    %71 = vector.load %arg7[%70, %c0_55, %c0_56] : memref<2x8x256xf32, #tpu.memory_space<vmem>>, vector<1x8x256xf32>
    %72 = vector.shape_cast %71 : vector<1x8x256xf32> to vector<8x256xf32>
    %73 = vector.broadcast %14 : vector<1x256xf32> to vector<8x256xf32>
    %74 = arith.mulf %72, %73 : vector<8x256xf32>
    %cst = arith.constant dense<0.000000e+00> : vector<8xf32>
    %75 = vector.multi_reduction <add>, %74, %cst [1] : vector<8x256xf32> to vector<8xf32>
    %76 = vector.broadcast %13 : f32 to vector<8xf32>
    %77 = arith.addf %75, %76 : vector<8xf32>
    %78 = vector.shape_cast %77 : vector<8xf32> to vector<1x1x8xf32>
    %c0_57 = arith.constant 0 : index
    %c0_58 = arith.constant 0 : index
    %c0_59 = arith.constant 0 : index
    %79 = vector.load %arg6[%c0_57, %c0_58, %c0_59] : memref<1x1x8xf32, #tpu.memory_space<vmem>>, vector<1x1x8xf32>
    tpu.vector_store %arg6[%c0_57, %c0_58, %c0_59], %78 {strides = array<i32>} : memref<1x1x8xf32, #tpu.memory_space<vmem>>, vector<1x1x8xf32>,
    return
  }
  func.func @transform_1(%arg0: i32, %arg1: i32, %arg2: memref<32xi32, #tpu.memory_space<smem>>) -> (i32, i32) {
    %c0_i32 = arith.constant 0 : i32
    %c0_i32_0 = arith.constant 0 : i32
    %c0_i32_1 = arith.constant 0 : i32
    return %c0_i32, %c0_i32_0 : i32, i32
  }
  func.func @transform_2(%arg0: i32, %arg1: i32, %arg2: memref<32xi32, #tpu.memory_space<smem>>) -> i32 {
    %c0_i32 = arith.constant 0 : i32
    %c0_i32_0 = arith.constant 0 : i32
    return %c0_i32 : i32
  }
  func.func @transform_3(%arg0: i32, %arg1: i32, %arg2: memref<32xi32, #tpu.memory_space<smem>>) -> (i32, i32, i32) {
    %c2_i32 = arith.constant 2 : i32
    %0 = arith.muli %arg0, %c2_i32 : i32
    %1 = arith.addi %0, %arg1 : i32
    %c0_i32 = arith.constant 0 : i32
    %c0_i32_0 = arith.constant 0 : i32
    %c0_i32_1 = arith.constant 0 : i32
    return %1, %c0_i32, %c0_i32_0 : i32, i32, i32
  }
}

</mosaic_0001>

<llo_original>
// kernel: tpu_custom_call.1
$region0: #{tpu_custom_call.1}
  #allocation0 [shape = 'u32[]', space=smem, size = 0x4, offset = 0x4, fixed_abs, tag = 'smem constant byte address 0x4 - core index']
  #allocation1 [shape = 'u32[144,128]{1,0:T(1,128)}', space=vmem, size = 0x12000, scoped, tag = 'internal scratch']
  #allocation2 [shape = 'f32[2,8,256]{2,1,0:T(8,128)}', space=vmem, size = 0x4000, scoped, tag = 'scratch operand']
  #allocation3 [shape = 's32[16]{0}', space=sflag, size = 0x40, scoped, tag = 'scratch operand']
  #allocation4 [shape = 's32[1]{0}', space=sflag, size = 0x4, scoped, tag = 'scoped memory for tpu_custom_call.1']
  #allocation5 [shape = 'u8[512]{0}', space=smem, size = 0x200, scoped, tag = 'prefetched SMEM operand 0']
  #allocation6 [shape = 'f32[1]{0:T(128)S(6)}', space=smem, size = 0x200, scoped, tag = 'scoped memory for tpu_custom_call.1']
  #allocation9 [shape = 's32[]', space=sflag, size = 0x4, offset = 0, fixed_abs, tag = 'sflag constant byte address 0x0 - dummy sync flag']
  #allocation10 [shape = 's32[]', space=sflag, size = 0x4, offset = 0, fixed_abs, tag = 'sflag constant byte address 0x0 - dummy sync flag']
  #allocation11 [shape = 's32[]', space=sflag, size = 0x4, offset = 0, fixed_abs, tag = 'sflag constant byte address 0x0 - dummy sync flag']
  #allocation12 [shape = 's32[]', space=sflag, size = 0x4, offset = 0, fixed_abs, tag = 'sflag constant byte address 0x0 - dummy sync flag']
  #allocation13 [shape = 's32[]', space=sflag, size = 0x4, offset = 0, fixed_abs, tag = 'sflag constant byte address 0x0 - dummy sync flag']
  #allocation14 [shape = 's32[]', space=sflag, size = 0x4, offset = 0, fixed_abs, tag = 'sflag constant byte address 0x0 - dummy sync flag']
  #allocation15 [shape = 's32[]', space=sflag, size = 0x4, offset = 0, fixed_abs, tag = 'sflag constant byte address 0x0 - dummy sync flag']
  #allocation16 [shape = 's32[]', space=sflag, size = 0x4, offset = 0, fixed_abs, tag = 'sflag constant byte address 0x0 - dummy sync flag']
  #allocation17 [shape = 's32[]', space=sflag, size = 0x4, offset = 0, fixed_abs, tag = 'sflag constant byte address 0x0 - dummy sync flag']
  #allocation18 [shape = 's32[]', space=sflag, size = 0x4, offset = 0, fixed_abs, tag = 'sflag constant byte address 0x0 - dummy sync flag']
  #allocation19 [shape = 's32[]', space=sflag, size = 0x4, offset = 0, fixed_abs, tag = 'sflag constant byte address 0x0 - dummy sync flag']
  #allocation20 [shape = 's32[]', space=sflag, size = 0x4, offset = 0, fixed_abs, tag = 'sflag constant byte address 0x0 - dummy sync flag']
  #allocation21 [shape = 's32[]', space=sflag, size = 0x4, offset = 0, fixed_abs, tag = 'sflag constant byte address 0x0 - dummy sync flag']
  #allocation22 [shape = 's32[]', space=sflag, size = 0x4, offset = 0, fixed_abs, tag = 'sflag constant byte address 0x0 - dummy sync flag']
  #allocation23 [shape = 's32[]', space=sflag, size = 0x4, offset = 0, fixed_abs, tag = 'sflag constant byte address 0x0 - dummy sync flag']
  #allocation24 [shape = 's32[]', space=sflag, size = 0x4, offset = 0, fixed_abs, tag = 'sflag constant byte address 0x0 - dummy sync flag']
  %s0 = inlined_call_operand.vmem [shape: s32[32], index: 0, kind: input, shape index: {}]
  %s1 = inlined_call_operand.hbm [shape: f32[32,16,256], index: 1, kind: input, shape index: {}]
  %s2 = inlined_call_operand.vmem [shape: f32[1,256], index: 2, kind: input, shape index: {}]
  %s3 = inlined_call_operand.<no memory space> [shape: f32[1], index: 3, kind: input, shape index: {}]
  %s4 = inlined_call_operand.hbm [shape: f32[4,1,8], index: 4, kind: output, shape index: {}]
  %s5 = sld [smem:[#allocation0]]
  $region49: #{tpu_custom_call.1} parent=0
    _
  %s7 = ssub.s32 1, %s5
  %s8 = scalar_select 0, %s7, %s5
  %s9 = sshll.u32 %s0, 4
  %s10 = int_to_ptr.vmem [resolvable:$true] %s9
  %12 = dma.vmem_to_smem %s10, 16, [#allocation5], [#allocation4]
  %13 = sst [smem:[#allocation6]] %s3
  %14 = dma.done [#allocation4], 16
  %15 = sfence
  $region1: #{tpu_custom_call.1} parent=0
    #allocation7 [shape = 'u8[1024]{0}', space=vmem, size = 0x400, scoped, tag = 'output window, operand 0']
    #allocation8 [shape = 's32[2]{0}', space=sflag, size = 0x8, scoped, tag = 'scoped memory for tpu_custom_call.1']
    %16 = vsyncpa [#allocation8], 0
    %s17 = scalar_lea.sflag [#allocation8], 1
    %18 = vsyncpa %s17, 0
    loop: start=0, step=1, limit=6
    $region2: #{tpu_custom_call.1} parent=1 // loop_pre_header
      _
    $region3: #{tpu_custom_call.1} parent=1 // loop_header
      %s20 = sphi 0, %s24
      %p21 = scmp.ge.s32.totalorder %s20, 6
      %s27 = sphi 0, %s39
      %s28 = sphi 0, %s35
      %s29 = sphi 0, %s27
      %s30 = sphi 0, %s28
      %s31 = sphi 0, %s29
      %s32 = sphi 0, %s30
      %s40 = sphi 0, %s40
      %s42 = sphi 0, %s40
      %s43 = sphi 0, %s42
      %s57 = sphi 0, %s43
      %s61 = sphi 0, %s61
      %s63 = sphi 0, %s61
      %s64 = sphi 0, %s63
      %s78 = sphi 0, %s64
      %s88 = sphi 0, %s90
      %s91 = sphi 0, %s88
      %s92 = sphi 0, %s91
      %s108 = sphi 0, %s92
    $region4: #{tpu_custom_call.1} parent=1 // loop_header_branch
      %23 = sbr.rel (%p21) target = $region8
    $region5: #{tpu_custom_call.1} parent=1 // loop_body
      %s25 = ssub.s32 %s20, 1
      %s26 = ssub.s32 %s20, 2
      %s33 = sadd.s32 1, %s28
      %p34 = scmp.ge.s32.totalorder %s33, 2
      %s35 = scalar_select %p34, 0, %s33
      %s36 = sadd.s32 1, %s27
      %s37 = scalar_select %p34, %s36, %s27
      %p38 = scmp.ge.s32.totalorder %s37, 2
      %s39 = scalar_select %p38, 0, %s37
      %s41 = sadd.s32 %s40, 1
      %p44 = scmp.eq.s32.totalorder %s20, 3
      %p45 = scmp.ne.s32.totalorder %s40, %s42
      %p46 = scmp.eq.s32.totalorder %s20, 0
      %p47 = por %p45, %p46
      %p48 = scmp.ne.s32.totalorder %s40, %s42
      %p49 = scmp.eq.s32.totalorder %s25, 3
      %p50 = por %p48, %p49
      %p51 = scmp.ne.s32.totalorder %s42, %s43
      %p52 = scmp.eq.s32.totalorder %s25, 0
      %p53 = por %p51, %p52
      %p54 = scmp.ne.s32.totalorder %s42, %s43
      %p55 = scmp.eq.s32.totalorder %s26, 3
      %p56 = por %p54, %p55
      %p58 = scmp.ne.s32.totalorder %s43, %s57
      %p59 = scmp.eq.s32.totalorder %s26, 0
      %p60 = por %p58, %p59
      %s62 = sadd.s32 %s61, 1
      %p65 = scmp.eq.s32.totalorder %s20, 3
      %p66 = scmp.ne.s32.totalorder %s61, %s63
      %p67 = scmp.eq.s32.totalorder %s20, 0
      %p68 = por %p66, %p67
      %p69 = scmp.ne.s32.totalorder %s61, %s63
      %p70 = scmp.eq.s32.totalorder %s25, 3
      %p71 = por %p69, %p70
      %p72 = scmp.ne.s32.totalorder %s63, %s64
      %p73 = scmp.eq.s32.totalorder %s25, 0
      %p74 = por %p72, %p73
      %p75 = scmp.ne.s32.totalorder %s63, %s64
      %p76 = scmp.eq.s32.totalorder %s26, 3
      %p77 = por %p75, %p76
      %p79 = scmp.ne.s32.totalorder %s64, %s78
      %p80 = scmp.eq.s32.totalorder %s26, 0
      %p81 = por %p79, %p80
      %s82 = smul.u32 %s27, 2
      %s83 = sadd.s32 %s82, %s28
      %s84 = smul.u32 %s39, 2
      %s85 = sadd.s32 %s84, %s35
      %s86 = ssub.s32 %s83, %s85
      %p87 = scmp.eq.s32.totalorder %s86, 0
      %s89 = sadd.s32 %s88, 1
      %s90 = scalar_select %p87, %s88, %s89
      %p93 = pneg %p87
      %p94 = scmp.eq.s32.totalorder %s20, 3
      %p95 = por %p93, %p94
      %p96 = scmp.ne.s32.totalorder %s88, %s91
      %p97 = scmp.eq.s32.totalorder %s20, 0
      %p98 = por %p96, %p97
      %p99 = scmp.ne.s32.totalorder %s88, %s91
      %p100 = scmp.eq.s32.totalorder %s25, 3
      %p101 = por %p99, %p100
      %p102 = scmp.ne.s32.totalorder %s91, %s92
      %p103 = scmp.eq.s32.totalorder %s25, 0
      %p104 = por %p102, %p103
      %p105 = scmp.ne.s32.totalorder %s91, %s92
      %p106 = scmp.eq.s32.totalorder %s26, 3
      %p107 = por %p105, %p106
      %p109 = scmp.ne.s32.totalorder %s92, %s108
      %p110 = scmp.eq.s32.totalorder %s26, 0
      %p111 = por %p109, %p110
      %p112 = scmp.le.s32.totalorder 1, %s20
      %p113 = scmp.lt.s32.totalorder %s20, 5
      %p114 = pnand %p112, %p113
      %p115 = pneg %p114
      // Predicated region
      $region9: #{tpu_custom_call.1} parent=5 // pred_check
        _
      $region10: #{tpu_custom_call.1} parent=5 // pred_check_branch
        %117 = sbr.rel (%p114) target = $region12
      $region11: #{tpu_custom_call.1} parent=5 // pred_region
        %s118 = ssub.s32 %s20, 1
        // Predicated region
        $region13: #{tpu_custom_call.1} parent=11 // pred_check
          %p119 = pneg %p53
        $region14: #{tpu_custom_call.1} parent=11 // pred_check_branch
          %121 = sbr.rel (%p119) target = $region16
        $region15: #{tpu_custom_call.1} parent=11 // pred_region
          _
        $region16: #{tpu_custom_call.1} parent=11 // pred_fallthru
          _
        // Predicated region
        $region17: #{tpu_custom_call.1} parent=11 // pred_check
          %p122 = pneg %p74
        $region18: #{tpu_custom_call.1} parent=11 // pred_check_branch
          %124 = sbr.rel (%p122) target = $region20
        $region19: #{tpu_custom_call.1} parent=11 // pred_region
          _
        $region20: #{tpu_custom_call.1} parent=11 // pred_fallthru
          _
      $region12: #{tpu_custom_call.1} parent=5 // pred_fallthru
        _
      %p125 = scmp.lt.s32.totalorder %s20, 4
      // Predicated region
      $region21: #{tpu_custom_call.1} parent=5 // pred_check
        %p126 = pneg %p125
      $region22: #{tpu_custom_call.1} parent=5 // pred_check_branch
        %128 = sbr.rel (%p126) target = $region24
      $region23: #{tpu_custom_call.1} parent=5 // pred_region
        _
      $region24: #{tpu_custom_call.1} parent=5 // pred_fallthru
        _
      %p129 = scmp.le.s32.totalorder 1, %s20
      %p130 = scmp.lt.s32.totalorder %s20, 5
      %p131 = pnand %p129, %p130
      %p132 = pneg %p131
      // Predicated region
      $region25: #{tpu_custom_call.1} parent=5 // pred_check
        _
      $region26: #{tpu_custom_call.1} parent=5 // pred_check_branch
        %134 = sbr.rel (%p131) target = $region28
      $region27: #{tpu_custom_call.1} parent=5 // pred_region
        %s135 = ssub.s32 %s20, 1
        %p136 = pneg %p53
        %p137 = pneg %p50
        %p138 = pneg %p74
        %p139 = pneg %p71
        %p140 = pneg %p104
        %p141 = pneg %p101
        %s142 = sand.u32 %s91, 1
        %s143 = scalar_lea.sflag [#allocation8], %s142
        %s144 = sand.u32 %s91, 1
        %s145 = scalar_lea.vmem [#allocation7], %s144
        %s146 = smul.u32 %s29, 2
        %s147 = sadd.s32 %s146, %s30
        %s148 = smul.u32 %s29, 2
        %s149 = sadd.s32 %s148, %s30
        %p150 = scmp.lt.s32.totalorder %s30, 0
        %s151 = ssub.s32 0, %s30
        %s152 = scalar_select %p150, %s151, %s30
        %s153 = sand.u32 %s152, 1
        %s154 = ssub.s32 0, %s153
        %s155 = scalar_select %p150, %s154, %s153
        %p156 = scmp.ne.s32.totalorder %s155, 0
        %p157 = scmp.lt.s32.totalorder %s155, 0
        %p158 = pnand %p157, %p156
        %p159 = pneg %p158
        %s160 = sadd.s32 %s155, 2
        %s161 = scalar_select %p159, %s160, %s155
        %s162 = ssub.s32 1, %s161
        %s163 = sld [smem:[#allocation6]]
        %v164 = vld [vmem:[%s2] sm:$0x3]
        %p165 = scmp.eq.s32.totalorder %s30, 0
        // Predicated region
        $region29: #{tpu_custom_call.1} parent=27 // pred_check
          %p166 = pneg %p165
        $region30: #{tpu_custom_call.1} parent=27 // pred_check_branch
          %168 = sbr.rel (%p166) target = $region32
        $region31: #{tpu_custom_call.1} parent=27 // pred_region
          %s169 = smul.u32 %s149, 8
          %p170 = scmp.lt.s32.totalorder %s169, 31
          %s171 = scalar_select %p170, %s169, 31
          %s172 = sld [smem:[#allocation5 + %s169]]
          %s173 = sshrl.u32 %s172, 3
          %s174 = sand.u32 %s172, 7
          %s175 = smul.u32 %s173, 16
          %s176 = sadd.s32 %s174, %s175
          %s177 = smul.u32 %s171, 32
          %s178 = sadd.s32 %s176, %s177
          %s179 = smul.addr %s178, 16
          %s180 = scalar_lea.hbm %s1, %s179
          %s182 = sshll.u32 [#allocation2], 4
          %s183 = int_to_ptr.vmem [resolvable:$true] %s182
          %185 = dma.hbm_to_vmem [thread:$0]  %s180, 32, %s183, [#allocation3], 128, 128, 1
          %s186 = sadd.s32 %s169, 1
          %p187 = scmp.lt.s32.totalorder %s186, 31
          %s188 = scalar_select %p187, %s186, 31
          %s189 = sld [smem:[#allocation5 + %s186]]
          %s190 = sshrl.u32 %s189, 3
          %s191 = sand.u32 %s189, 7
          %s192 = smul.u32 %s190, 16
          %s193 = sadd.s32 %s191, %s192
          %s194 = smul.u32 %s188, 32
          %s195 = sadd.s32 %s193, %s194
          %s196 = smul.addr %s195, 16
          %s197 = scalar_lea.hbm %s1, %s196
          %s198 = scalar_lea.vmem [#allocation2], 1
          %s199 = scalar_lea.sflag [#allocation3], 1
          %s201 = sshll.u32 %s198, 4
          %s202 = int_to_ptr.vmem [resolvable:$true] %s201
          %204 = dma.hbm_to_vmem [thread:$0]  %s197, 32, %s202, %s199, 128, 128, 1
          %s205 = sadd.s32 %s169, 2
          %p206 = scmp.lt.s32.totalorder %s205, 31
          %s207 = scalar_select %p206, %s205, 31
          %s208 = sld [smem:[#allocation5 + %s205]]
          %s209 = sshrl.u32 %s208, 3
          %s210 = sand.u32 %s208, 7
          %s211 = smul.u32 %s209, 16
          %s212 = sadd.s32 %s210, %s211
          %s213 = smul.u32 %s207, 32
          %s214 = sadd.s32 %s212, %s213
          %s215 = smul.addr %s214, 16
          %s216 = scalar_lea.hbm %s1, %s215
          %s217 = scalar_lea.vmem [#allocation2], 2
          %s218 = scalar_lea.sflag [#allocation3], 2
          %s220 = sshll.u32 %s217, 4
          %s221 = int_to_ptr.vmem [resolvable:$true] %s220
          %223 = dma.hbm_to_vmem [thread:$0]  %s216, 32, %s221, %s218, 128, 128, 1
          %s224 = sadd.s32 %s169, 3
          %p225 = scmp.lt.s32.totalorder %s224, 31
          %s226 = scalar_select %p225, %s224, 31
          %s227 = sld [smem:[#allocation5 + %s224]]
          %s228 = sshrl.u32 %s227, 3
          %s229 = sand.u32 %s227, 7
          %s230 = smul.u32 %s228, 16
          %s231 = sadd.s32 %s229, %s230
          %s232 = smul.u32 %s226, 32
          %s233 = sadd.s32 %s231, %s232
          %s234 = smul.addr %s233, 16
          %s235 = scalar_lea.hbm %s1, %s234
          %s236 = scalar_lea.vmem [#allocation2], 3
          %s237 = scalar_lea.sflag [#allocation3], 3
          %s239 = sshll.u32 %s236, 4
          %s240 = int_to_ptr.vmem [resolvable:$true] %s239
          %242 = dma.hbm_to_vmem [thread:$0]  %s235, 32, %s240, %s237, 128, 128, 1
          %s243 = sadd.s32 %s169, 4
          %p244 = scmp.lt.s32.totalorder %s243, 31
          %s245 = scalar_select %p244, %s243, 31
          %s246 = sld [smem:[#allocation5 + %s243]]
          %s247 = sshrl.u32 %s246, 3
          %s248 = sand.u32 %s246, 7
          %s249 = smul.u32 %s247, 16
          %s250 = sadd.s32 %s248, %s249
          %s251 = smul.u32 %s245, 32
          %s252 = sadd.s32 %s250, %s251
          %s253 = smul.addr %s252, 16
          %s254 = scalar_lea.hbm %s1, %s253
          %s255 = scalar_lea.vmem [#allocation2], 4
          %s256 = scalar_lea.sflag [#allocation3], 4
          %s258 = sshll.u32 %s255, 4
          %s259 = int_to_ptr.vmem [resolvable:$true] %s258
          %261 = dma.hbm_to_vmem [thread:$0]  %s254, 32, %s259, %s256, 128, 128, 1
          %s262 = sadd.s32 %s169, 5
          %p263 = scmp.lt.s32.totalorder %s262, 31
          %s264 = scalar_select %p263, %s262, 31
          %s265 = sld [smem:[#allocation5 + %s262]]
          %s266 = sshrl.u32 %s265, 3
          %s267 = sand.u32 %s265, 7
          %s268 = smul.u32 %s266, 16
          %s269 = sadd.s32 %s267, %s268
          %s270 = smul.u32 %s264, 32
          %s271 = sadd.s32 %s269, %s270
          %s272 = smul.addr %s271, 16
          %s273 = scalar_lea.hbm %s1, %s272
          %s274 = scalar_lea.vmem [#allocation2], 5
          %s275 = scalar_lea.sflag [#allocation3], 5
          %s277 = sshll.u32 %s274, 4
          %s278 = int_to_ptr.vmem [resolvable:$true] %s277
          %280 = dma.hbm_to_vmem [thread:$0]  %s273, 32, %s278, %s275, 128, 128, 1
          %s281 = sadd.s32 %s169, 6
          %p282 = scmp.lt.s32.totalorder %s281, 31
          %s283 = scalar_select %p282, %s281, 31
          %s284 = sld [smem:[#allocation5 + %s281]]
          %s285 = sshrl.u32 %s284, 3
          %s286 = sand.u32 %s284, 7
          %s287 = smul.u32 %s285, 16
          %s288 = sadd.s32 %s286, %s287
          %s289 = smul.u32 %s283, 32
          %s290 = sadd.s32 %s288, %s289
          %s291 = smul.addr %s290, 16
          %s292 = scalar_lea.hbm %s1, %s291
          %s293 = scalar_lea.vmem [#allocation2], 6
          %s294 = scalar_lea.sflag [#allocation3], 6
          %s296 = sshll.u32 %s293, 4
          %s297 = int_to_ptr.vmem [resolvable:$true] %s296
          %299 = dma.hbm_to_vmem [thread:$0]  %s292, 32, %s297, %s294, 128, 128, 1
          %s300 = sadd.s32 %s169, 7
          %p301 = scmp.lt.s32.totalorder %s300, 31
          %s302 = scalar_select %p301, %s300, 31
          %s303 = sld [smem:[#allocation5 + %s300]]
          %s304 = sshrl.u32 %s303, 3
          %s305 = sand.u32 %s303, 7
          %s306 = smul.u32 %s304, 16
          %s307 = sadd.s32 %s305, %s306
          %s308 = smul.u32 %s302, 32
          %s309 = sadd.s32 %s307, %s308
          %s310 = smul.addr %s309, 16
          %s311 = scalar_lea.hbm %s1, %s310
          %s312 = scalar_lea.vmem [#allocation2], 7
          %s313 = scalar_lea.sflag [#allocation3], 7
          %s315 = sshll.u32 %s312, 4
          %s316 = int_to_ptr.vmem [resolvable:$true] %s315
          %318 = dma.hbm_to_vmem [thread:$0]  %s311, 32, %s316, %s313, 128, 128, 1
        $region32: #{tpu_custom_call.1} parent=27 // pred_fallthru
          _
        %s319 = sadd.s32 %s30, 1
        %p320 = scmp.lt.s32.totalorder %s319, 2
        // Predicated region
        $region33: #{tpu_custom_call.1} parent=27 // pred_check
          %p321 = pneg %p320
        $region34: #{tpu_custom_call.1} parent=27 // pred_check_branch
          %323 = sbr.rel (%p321) target = $region36
        $region35: #{tpu_custom_call.1} parent=27 // pred_region
          %s324 = sadd.s32 %s149, 1
          %s325 = smul.u32 %s324, 8
          %p326 = scmp.lt.s32.totalorder %s325, 31
          %s327 = scalar_select %p326, %s325, 31
          %s328 = sld [smem:[#allocation5 + %s325]]
          %s329 = sshrl.u32 %s328, 3
          %s330 = sand.u32 %s328, 7
          %s331 = smul.u32 %s329, 16
          %s332 = sadd.s32 %s330, %s331
          %s333 = smul.u32 %s327, 32
          %s334 = sadd.s32 %s332, %s333
          %s335 = smul.addr %s334, 16
          %s336 = scalar_lea.hbm %s1, %s335
          %s337 = smul.u32 %s162, 16
          %s338 = scalar_lea.vmem [#allocation2], %s337
          %s339 = smul.u32 %s162, 8
          %s340 = scalar_lea.sflag [#allocation3], %s339
          %s342 = sshll.u32 %s338, 4
          %s343 = int_to_ptr.vmem [resolvable:$true] %s342
          %345 = dma.hbm_to_vmem [thread:$0]  %s336, 32, %s343, %s340, 128, 128, 1
          %s346 = sadd.s32 %s325, 1
          %p347 = scmp.lt.s32.totalorder %s346, 31
          %s348 = scalar_select %p347, %s346, 31
          %s349 = sld [smem:[#allocation5 + %s346]]
          %s350 = sshrl.u32 %s349, 3
          %s351 = sand.u32 %s349, 7
          %s352 = smul.u32 %s350, 16
          %s353 = sadd.s32 %s351, %s352
          %s354 = smul.u32 %s348, 32
          %s355 = sadd.s32 %s353, %s354
          %s356 = smul.addr %s355, 16
          %s357 = scalar_lea.hbm %s1, %s356
          %s358 = sadd.s32 1, %s337
          %s359 = scalar_lea.vmem [#allocation2], %s358
          %s360 = sadd.s32 1, %s339
          %s361 = scalar_lea.sflag [#allocation3], %s360
          %s363 = sshll.u32 %s359, 4
          %s364 = int_to_ptr.vmem [resolvable:$true] %s363
          %366 = dma.hbm_to_vmem [thread:$0]  %s357, 32, %s364, %s361, 128, 128, 1
          %s367 = sadd.s32 %s325, 2
          %p368 = scmp.lt.s32.totalorder %s367, 31
          %s369 = scalar_select %p368, %s367, 31
          %s370 = sld [smem:[#allocation5 + %s367]]
          %s371 = sshrl.u32 %s370, 3
          %s372 = sand.u32 %s370, 7
          %s373 = smul.u32 %s371, 16
          %s374 = sadd.s32 %s372, %s373
          %s375 = smul.u32 %s369, 32
          %s376 = sadd.s32 %s374, %s375
          %s377 = smul.addr %s376, 16
          %s378 = scalar_lea.hbm %s1, %s377
          %s379 = sadd.s32 2, %s337
          %s380 = scalar_lea.vmem [#allocation2], %s379
          %s381 = sadd.s32 2, %s339
          %s382 = scalar_lea.sflag [#allocation3], %s381
          %s384 = sshll.u32 %s380, 4
          %s385 = int_to_ptr.vmem [resolvable:$true] %s384
          %387 = dma.hbm_to_vmem [thread:$0]  %s378, 32, %s385, %s382, 128, 128, 1
          %s388 = sadd.s32 %s325, 3
          %p389 = scmp.lt.s32.totalorder %s388, 31
          %s390 = scalar_select %p389, %s388, 31
          %s391 = sld [smem:[#allocation5 + %s388]]
          %s392 = sshrl.u32 %s391, 3
          %s393 = sand.u32 %s391, 7
          %s394 = smul.u32 %s392, 16
          %s395 = sadd.s32 %s393, %s394
          %s396 = smul.u32 %s390, 32
          %s397 = sadd.s32 %s395, %s396
          %s398 = smul.addr %s397, 16
          %s399 = scalar_lea.hbm %s1, %s398
          %s400 = sadd.s32 3, %s337
          %s401 = scalar_lea.vmem [#allocation2], %s400
          %s402 = sadd.s32 3, %s339
          %s403 = scalar_lea.sflag [#allocation3], %s402
          %s405 = sshll.u32 %s401, 4
          %s406 = int_to_ptr.vmem [resolvable:$true] %s405
          %408 = dma.hbm_to_vmem [thread:$0]  %s399, 32, %s406, %s403, 128, 128, 1
          %s409 = sadd.s32 %s325, 4
          %p410 = scmp.lt.s32.totalorder %s409, 31
          %s411 = scalar_select %p410, %s409, 31
          %s412 = sld [smem:[#allocation5 + %s409]]
          %s413 = sshrl.u32 %s412, 3
          %s414 = sand.u32 %s412, 7
          %s415 = smul.u32 %s413, 16
          %s416 = sadd.s32 %s414, %s415
          %s417 = smul.u32 %s411, 32
          %s418 = sadd.s32 %s416, %s417
          %s419 = smul.addr %s418, 16
          %s420 = scalar_lea.hbm %s1, %s419
          %s421 = sadd.s32 4, %s337
          %s422 = scalar_lea.vmem [#allocation2], %s421
          %s423 = sadd.s32 4, %s339
          %s424 = scalar_lea.sflag [#allocation3], %s423
          %s426 = sshll.u32 %s422, 4
          %s427 = int_to_ptr.vmem [resolvable:$true] %s426
          %429 = dma.hbm_to_vmem [thread:$0]  %s420, 32, %s427, %s424, 128, 128, 1
          %s430 = sadd.s32 %s325, 5
          %p431 = scmp.lt.s32.totalorder %s430, 31
          %s432 = scalar_select %p431, %s430, 31
          %s433 = sld [smem:[#allocation5 + %s430]]
          %s434 = sshrl.u32 %s433, 3
          %s435 = sand.u32 %s433, 7
          %s436 = smul.u32 %s434, 16
          %s437 = sadd.s32 %s435, %s436
          %s438 = smul.u32 %s432, 32
          %s439 = sadd.s32 %s437, %s438
          %s440 = smul.addr %s439, 16
          %s441 = scalar_lea.hbm %s1, %s440
          %s442 = sadd.s32 5, %s337
          %s443 = scalar_lea.vmem [#allocation2], %s442
          %s444 = sadd.s32 5, %s339
          %s445 = scalar_lea.sflag [#allocation3], %s444
          %s447 = sshll.u32 %s443, 4
          %s448 = int_to_ptr.vmem [resolvable:$true] %s447
          %450 = dma.hbm_to_vmem [thread:$0]  %s441, 32, %s448, %s445, 128, 128, 1
          %s451 = sadd.s32 %s325, 6
          %p452 = scmp.lt.s32.totalorder %s451, 31
          %s453 = scalar_select %p452, %s451, 31
          %s454 = sld [smem:[#allocation5 + %s451]]
          %s455 = sshrl.u32 %s454, 3
          %s456 = sand.u32 %s454, 7
          %s457 = smul.u32 %s455, 16
          %s458 = sadd.s32 %s456, %s457
          %s459 = smul.u32 %s453, 32
          %s460 = sadd.s32 %s458, %s459
          %s461 = smul.addr %s460, 16
          %s462 = scalar_lea.hbm %s1, %s461
          %s463 = sadd.s32 6, %s337
          %s464 = scalar_lea.vmem [#allocation2], %s463
          %s465 = sadd.s32 6, %s339
          %s466 = scalar_lea.sflag [#allocation3], %s465
          %s468 = sshll.u32 %s464, 4
          %s469 = int_to_ptr.vmem [resolvable:$true] %s468
          %471 = dma.hbm_to_vmem [thread:$0]  %s462, 32, %s469, %s466, 128, 128, 1
          %s472 = sadd.s32 %s325, 7
          %p473 = scmp.lt.s32.totalorder %s472, 31
          %s474 = scalar_select %p473, %s472, 31
          %s475 = sld [smem:[#allocation5 + %s472]]
          %s476 = sshrl.u32 %s475, 3
          %s477 = sand.u32 %s475, 7
          %s478 = smul.u32 %s476, 16
          %s479 = sadd.s32 %s477, %s478
          %s480 = smul.u32 %s474, 32
          %s481 = sadd.s32 %s479, %s480
          %s482 = smul.addr %s481, 16
          %s483 = scalar_lea.hbm %s1, %s482
          %s484 = sadd.s32 7, %s337
          %s485 = scalar_lea.vmem [#allocation2], %s484
          %s486 = sadd.s32 7, %s339
          %s487 = scalar_lea.sflag [#allocation3], %s486
          %s489 = sshll.u32 %s485, 4
          %s490 = int_to_ptr.vmem [resolvable:$true] %s489
          %492 = dma.hbm_to_vmem [thread:$0]  %s483, 32, %s490, %s487, 128, 128, 1
        $region36: #{tpu_custom_call.1} parent=27 // pred_fallthru
          _
        %s493 = smul.u32 %s161, 8
        %s494 = scalar_lea.sflag [#allocation3], %s493
        %s495 = smul.u32 1, 2
        %s496 = sshll.u32 %s495, 4
        %497 = dma.done %s494, %s496
        %s498 = sadd.s32 1, %s493
        %s499 = scalar_lea.sflag [#allocation3], %s498
        %s500 = sshll.u32 %s495, 4
        %501 = dma.done %s499, %s500
        %s502 = sadd.s32 2, %s493
        %s503 = scalar_lea.sflag [#allocation3], %s502
        %s504 = sshll.u32 %s495, 4
        %505 = dma.done %s503, %s504
        %s506 = sadd.s32 3, %s493
        %s507 = scalar_lea.sflag [#allocation3], %s506
        %s508 = sshll.u32 %s495, 4
        %509 = dma.done %s507, %s508
        %s510 = sadd.s32 4, %s493
        %s511 = scalar_lea.sflag [#allocation3], %s510
        %s512 = sshll.u32 %s495, 4
        %513 = dma.done %s511, %s512
        %s514 = sadd.s32 5, %s493
        %s515 = scalar_lea.sflag [#allocation3], %s514
        %s516 = sshll.u32 %s495, 4
        %517 = dma.done %s515, %s516
        %s518 = sadd.s32 6, %s493
        %s519 = scalar_lea.sflag [#allocation3], %s518
        %s520 = sshll.u32 %s495, 4
        %521 = dma.done %s519, %s520
        %s522 = sadd.s32 7, %s493
        %s523 = scalar_lea.sflag [#allocation3], %s522
        %s524 = sshll.u32 %s495, 4
        %525 = dma.done %s523, %s524
        %s526 = smul.u32 %s161, 2
        %s527 = smul.addr %s526, 8
        %s528 = scalar_lea.vmem [#allocation2], %s527
        %v529 = vld [vmem:[%s528] sm:$0xff]
        %v530 = vld [vmem:[%s528 + $0x8] sm:$0xff]
        %v532 = vlaneseq
        %v533 = vshrl.u32 %v532, 7
        %v534 = vsub.s32 0, %v533
        %v535 = vrot.slane %v164, %v534
        %v536 = vlaneseq
        %v537 = vshrl.u32 %v536, 7
        %v538 = vsub.s32 1, %v537
        %v539 = vrot.slane %v164, %v538
        %v542 = vmul.f32 %v529, %v535
        %v543 = vmul.f32 %v530, %v539
        %v544 = vadd.f32 %v542, %v543
        %545 = vadd.xlane.f32.xlu0 %v544
        %v546 = vpop.xlane.xlu0 %545
        %v547 = vstv %s163
        %v548 = vadd.f32 %v546, %v547
        %v550 = vlaneseq
        %v551 = vand.u32 %v550, 127
        %v552 = vlaneseq
        %v553 = vshrl.u32 %v552, 7
        %v554 = vsub.s32 %v551, %v553
        %v555 = vrot.slane %v548, %v554
        %vm557 = vcmask 57344
        %558 = vst.msk [vmem:[%s145] sm:$0x1] %vm557, %v555
        %s559 = sand.u32 %s91, 1
        %s560 = scalar_lea.sflag [#allocation8], %s559
        %s561 = sand.u32 %s91, 1
        %s562 = scalar_lea.vmem [#allocation7], %s561
        // Predicated region
        $region37: #{tpu_custom_call.1} parent=27 // pred_check
          %p563 = pneg %p101
        $region38: #{tpu_custom_call.1} parent=27 // pred_check_branch
          %565 = sbr.rel (%p563) target = $region40
        $region39: #{tpu_custom_call.1} parent=27 // pred_region
          %s566 = smul.u32 %s29, 2
          %s567 = sadd.s32 %s566, %s30
          %s569 = ssub.s32 16, 16
          %570 = vsyncadd %s560, %s569
          %s571 = smul.addr %s567, 16
          %s572 = scalar_lea.hbm %s4, %s571
          %s574 = sshll.u32 %s562, 4
          %s575 = int_to_ptr.vmem [resolvable:$true] %s574
          %577 = dma.vmem_to_hbm [thread:$0]  %s575, 16, %s572, %s560
        $region40: #{tpu_custom_call.1} parent=27 // pred_fallthru
          _
      $region28: #{tpu_custom_call.1} parent=5 // pred_fallthru
        _
      %p578 = scmp.le.s32.totalorder 2, %s20
      // Predicated region
      $region41: #{tpu_custom_call.1} parent=5 // pred_check
        %p579 = pneg %p578
      $region42: #{tpu_custom_call.1} parent=5 // pred_check_branch
        %581 = sbr.rel (%p579) target = $region44
      $region43: #{tpu_custom_call.1} parent=5 // pred_region
        %s582 = ssub.s32 %s20, 2
        // Predicated region
        $region45: #{tpu_custom_call.1} parent=43 // pred_check
          %p583 = pneg %p107
        $region46: #{tpu_custom_call.1} parent=43 // pred_check_branch
          %585 = sbr.rel (%p583) target = $region48
        $region47: #{tpu_custom_call.1} parent=43 // pred_region
          %s586 = sand.u32 %s92, 1
          %s587 = scalar_lea.sflag [#allocation8], %s586
          %s588 = sand.u32 %s92, 1
          %s589 = scalar_lea.vmem [#allocation7], %s588
          %590 = dma.done %s587, 16
        $region48: #{tpu_custom_call.1} parent=43 // pred_fallthru
          _
      $region44: #{tpu_custom_call.1} parent=5 // pred_fallthru
        _
    $region6: #{tpu_custom_call.1} parent=1 // loop_footer
      %s24 = sadd.s32 1, %s20
    $region7: #{tpu_custom_call.1} parent=1 // loop_footer_branch
      %19 = sbr.rel target = $region3
    $region8: #{tpu_custom_call.1} parent=1 // loop_exit
      _
    %591 = vsyncpa [#allocation8], 1
    %s592 = scalar_lea.sflag [#allocation8], 1
    %593 = vsyncpa %s592, 1
  %594 = vsyncmov [#allocation3]
  %s595 = vpop.sfrf %594
  %p596 = scmp.eq.s32.totalorder %s595, 0
  %p597 = pneg %p596
  %599 = shalt.err (%p597)
  %s600 = scalar_lea.sflag [#allocation3], 1
  %601 = vsyncmov %s600
  %s602 = vpop.sfrf %601
  %p603 = scmp.eq.s32.totalorder %s602, 0
  %p604 = pneg %p603
  %606 = shalt.err (%p604)
  %s607 = scalar_lea.sflag [#allocation3], 2
  %608 = vsyncmov %s607
  %s609 = vpop.sfrf %608
  %p610 = scmp.eq.s32.totalorder %s609, 0
  %p611 = pneg %p610
  %613 = shalt.err (%p611)
  %s614 = scalar_lea.sflag [#allocation3], 3
  %615 = vsyncmov %s614
  %s616 = vpop.sfrf %615
  %p617 = scmp.eq.s32.totalorder %s616, 0
  %p618 = pneg %p617
  %620 = shalt.err (%p618)
  %s621 = scalar_lea.sflag [#allocation3], 4
  %622 = vsyncmov %s621
  %s623 = vpop.sfrf %622
  %p624 = scmp.eq.s32.totalorder %s623, 0
  %p625 = pneg %p624
  %627 = shalt.err (%p625)
  %s628 = scalar_lea.sflag [#allocation3], 5
  %629 = vsyncmov %s628
  %s630 = vpop.sfrf %629
  %p631 = scmp.eq.s32.totalorder %s630, 0
  %p632 = pneg %p631
  %634 = shalt.err (%p632)
  %s635 = scalar_lea.sflag [#allocation3], 6
  %636 = vsyncmov %s635
  %s637 = vpop.sfrf %636
  %p638 = scmp.eq.s32.totalorder %s637, 0
  %p639 = pneg %p638
  %641 = shalt.err (%p639)
  %s642 = scalar_lea.sflag [#allocation3], 7
  %643 = vsyncmov %s642
  %s644 = vpop.sfrf %643
  %p645 = scmp.eq.s32.totalorder %s644, 0
  %p646 = pneg %p645
  %648 = shalt.err (%p646)
  %s649 = scalar_lea.sflag [#allocation3], 8
  %650 = vsyncmov %s649
  %s651 = vpop.sfrf %650
  %p652 = scmp.eq.s32.totalorder %s651, 0
  %p653 = pneg %p652
  %655 = shalt.err (%p653)
  %s656 = scalar_lea.sflag [#allocation3], 9
  %657 = vsyncmov %s656
  %s658 = vpop.sfrf %657
  %p659 = scmp.eq.s32.totalorder %s658, 0
  %p660 = pneg %p659
  %662 = shalt.err (%p660)
  %s663 = scalar_lea.sflag [#allocation3], 10
  %664 = vsyncmov %s663
  %s665 = vpop.sfrf %664
  %p666 = scmp.eq.s32.totalorder %s665, 0
  %p667 = pneg %p666
  %669 = shalt.err (%p667)
  %s670 = scalar_lea.sflag [#allocation3], 11
  %671 = vsyncmov %s670
  %s672 = vpop.sfrf %671
  %p673 = scmp.eq.s32.totalorder %s672, 0
  %p674 = pneg %p673
  %676 = shalt.err (%p674)
  %s677 = scalar_lea.sflag [#allocation3], 12
  %678 = vsyncmov %s677
  %s679 = vpop.sfrf %678
  %p680 = scmp.eq.s32.totalorder %s679, 0
  %p681 = pneg %p680
  %683 = shalt.err (%p681)
  %s684 = scalar_lea.sflag [#allocation3], 13
  %685 = vsyncmov %s684
  %s686 = vpop.sfrf %685
  %p687 = scmp.eq.s32.totalorder %s686, 0
  %p688 = pneg %p687
  %690 = shalt.err (%p688)
  %s691 = scalar_lea.sflag [#allocation3], 14
  %692 = vsyncmov %s691
  %s693 = vpop.sfrf %692
  %p694 = scmp.eq.s32.totalorder %s693, 0
  %p695 = pneg %p694
  %697 = shalt.err (%p695)
  %s698 = scalar_lea.sflag [#allocation3], 15
  %699 = vsyncmov %s698
  %s700 = vpop.sfrf %699
  %p701 = scmp.eq.s32.totalorder %s700, 0
  %p702 = pneg %p701
  %704 = shalt.err (%p702)

</llo_original>
